<compile_context>
chip_gen: v6e
topology: v6e:2x2x1
jax: 0.10.0
libtpu: 0.0.40
codegen_flags: <defaults>
</compile_context>

<pallas_src>
import functools

import jax
import jax.numpy as jnp
from jax import lax
from jax.experimental import pallas as pl
from jax.experimental.pallas import tpu as pltpu


def _dense_mlp_kernel(slope, num_layers, x_ref, *refs):
    """Fused MLP on a feature-major (features, TILE_B) compute layout.

    refs layout: w_0, b_0, w_1, b_1, ..., w_{L-1}, b_{L-1}, o_ref
      w_i:   (out_i, in_i) bf16  (PyTorch Linear layout, pre-cast on host)
      b_i:   (out_i, 1)    f32
      x_ref: (TILE_B, in)  f32   (batch-major, straight from HBM)
      o_ref: (TILE_B, out) f32   (batch-major)
    """
    o_ref = refs[-1]
    params = refs[:-1]

    def lrelu(v):
        return jnp.where(v > 0, v, slope * v)

    # First layer: contract the minor dims of w0 (out0, in) and x (TILE_B, in)
    # -> (out0, TILE_B).  This is the native transposed-rhs MXU matmul
    # (flash-attention q@k^T pattern), so the batch lands on the 128-lane axis
    # without an explicit transpose of the narrow x tile.
    x = x_ref[...].astype(jnp.bfloat16)
    w0, b0 = params[0][...], params[1][...]
    h = lax.dot_general(w0, x, (((1,), (1,)), ((), ())),
                        preferred_element_type=jnp.float32) + b0
    h = lrelu(h)                                       # (hidden, TILE_B) f32

    # Hidden blocks: Linear -> LeakyReLU -> Dropout (identity for p=0 / eval).
    for i in range(1, num_layers - 1):
        w, b = params[2 * i][...], params[2 * i + 1][...]
        h = jnp.dot(w, h.astype(jnp.bfloat16),
                    preferred_element_type=jnp.float32) + b
        h = lrelu(h)
        # TODO(synk): training-mode dropout (p>0): pltpu.prng_seed +
        # pltpu.prng_random_bits mask right here, inside the same kernel.

    # Last layer: Linear only.  Transpose the small (out, TILE_B) result back
    # to batch-major in-kernel (a handful of masked vst per step) instead of
    # paying a separate wrapper-side XLA transpose kernel + HBM round trip.
    w_l = params[2 * (num_layers - 1)][...]
    b_l = params[2 * (num_layers - 1) + 1][...]
    y = jnp.dot(w_l, h.astype(jnp.bfloat16),
                preferred_element_type=jnp.float32) + b_l   # (out, TILE_B) f32
    o_ref[...] = y.T                                        # (TILE_B, out) f32


def _round_up(x, m):
    return m * pl.cdiv(x, m)


def _pick_tile_b(batch, requested=None):
    """Generation-aware batch tile (lane-dense multiple of 256, <= 1024)."""
    LANE = 256      # lane-dense (mult of 128) + full MXU N on v6e/v7x
    MAX_TILE = 1024  # vreg pressure (h is (hidden, tile_b) f32) binds, not VMEM
    if requested is not None:
        return max(LANE, _round_up(requested, LANE))
    padded = _round_up(batch, LANE)
    try:
        kind = jax.devices()[0].device_kind.lower()
    except Exception:
        kind = ""
    if ("v7" in kind) or ("7x" in kind):
        # 2 TensorCores per chip: want >=2 balanced "parallel" grid steps.
        half = _round_up(pl.cdiv(padded, 2), LANE)
        return max(LANE, min(half, MAX_TILE))
    # Single TensorCore (v5e / v6e / others): fewest pipeline steps wins.
    return min(padded, MAX_TILE)


def prepare_dense_params(weights, biases):
    """One-time host-side prep: weights -> bf16 (MXU-native), biases -> (out,1) f32."""
    w_bf16 = [w.astype(jnp.bfloat16) for w in weights]
    b_col = [b.reshape(-1, 1).astype(jnp.float32) for b in biases]
    return w_bf16, b_col


def dense_module_forward(x, weights_bf16, biases_col, *, act_param=0.01,
                         tile_b=None):
    """Fused DenseModule forward: one gridded pallas_call, no wrapper XLA ops
    on the main (batch % tile_b == 0) path.

    x:            (batch, in_features) f32
    weights_bf16: list of (out_i, in_i) bf16 arrays (PyTorch Linear layout)
    biases_col:   list of (out_i, 1) f32 arrays
    Returns (batch, out_features) f32.
    """
    num_layers = len(weights_bf16)
    assert num_layers >= 2 and len(biases_col) == num_layers

    batch, in_size = x.shape
    out_size = weights_bf16[-1].shape[0]

    tile_b = _pick_tile_b(batch, tile_b)
    padded_batch = tile_b * pl.cdiv(batch, tile_b)

    x_in = x
    if padded_batch != batch:
        # Ragged batch only: pad the batch (lane) dim so stores stay lane-dense.
        # Pad rows produce garbage through bias+activation and are sliced off;
        # nothing in the kernel reduces over the batch axis.
        x_in = jnp.pad(x, ((0, padded_batch - batch), (0, 0)))

    grid = (padded_batch // tile_b,)

    # x / out stream along the grid; weights + biases stay resident in VMEM
    # (constant index_map => fetched once, not per step).
    in_specs = [pl.BlockSpec((tile_b, in_size), lambda i: (i, 0))]
    param_args = []
    for w, b in zip(weights_bf16, biases_col):
        param_args.append(w)
        param_args.append(b)
        in_specs.append(pl.BlockSpec(w.shape, lambda i: (0, 0)))
        in_specs.append(pl.BlockSpec(b.shape, lambda i: (0, 0)))
    out_specs = pl.BlockSpec((tile_b, out_size), lambda i: (i, 0))

    # Advisory cost estimate for XLA's scheduler.
    flops = 2 * padded_batch * sum(int(w.shape[0]) * int(w.shape[1])
                                   for w in weights_bf16)
    param_bytes = sum(int(w.size) * 2 + int(b.size) * 4
                      for w, b in zip(weights_bf16, biases_col))
    bytes_accessed = padded_batch * (in_size + out_size) * 4 + param_bytes
    cost = pl.CostEstimate(flops=flops, transcendentals=0,
                           bytes_accessed=bytes_accessed)

    kernel = functools.partial(_dense_mlp_kernel, act_param, num_layers)

    out = pl.pallas_call(
        kernel,
        out_shape=jax.ShapeDtypeStruct((padded_batch, out_size), jnp.float32),
        grid=grid,
        in_specs=in_specs,
        out_specs=out_specs,
        compiler_params=pltpu.CompilerParams(
            # Megacore sharding on v7x; free elsewhere.  Total VMEM footprint
            # is <1 MiB, so no vmem_limit override is needed on any generation.
            dimension_semantics=("parallel",),
        ),
        cost_estimate=cost,
    )(x_in, *param_args)

    if padded_batch != batch:
        out = out[:batch]
    return out


def init_dense_module_params(key, num_layers, input_size, output_size,
                             hidden_size):
    """Deterministic init mimicking PyTorch Linear (uniform +-1/sqrt(fan_in)).

    Returns f32 weights as (out, in) (PyTorch layout) and f32 biases as (out,).
    """
    assert num_layers >= 2
    sizes = [input_size] + [hidden_size] * (num_layers - 1) + [output_size]
    weights, biases = [], []
    for i in range(num_layers):
        fan_in, fan_out = sizes[i], sizes[i + 1]
        key, kw, kb = jax.random.split(key, 3)
        bound = 1.0 / float(fan_in) ** 0.5
        w = jax.random.uniform(kw, (fan_out, fan_in), jnp.float32,
                               minval=-bound, maxval=bound)
        b = jax.random.uniform(kb, (fan_out,), jnp.float32,
                               minval=-bound, maxval=bound)
        weights.append(w)
        biases.append(b)
    return weights, biases


def reference_forward(x, weights, biases, act_param=0.01, matmul_dtype=None):
    """Pure-JAX reference.  matmul_dtype=jnp.bfloat16 mimics the kernel's
    MXU precision (bf16 operands, f32 accumulate, f32 bias + activation)."""
    h = x
    n = len(weights)
    for i, (w, b) in enumerate(zip(weights, biases)):
        if matmul_dtype is not None:
            hm, wm = h.astype(matmul_dtype), w.astype(matmul_dtype)
        else:
            hm, wm = h, w
        h = jnp.dot(hm, wm.T, preferred_element_type=jnp.float32) + b
        if i < n - 1:
            h = jnp.where(h > 0, h, act_param * h)
    return h


if __name__ == "__main__":
    # DenseModule(cfg(act_type='lrelu', act_param=0.01), num_layers=3,
    #             input_size=16, output_size=8, hidden_size=32, dropout_prob=0)
    num_layers, input_size, hidden_size, output_size = 3, 16, 32, 8
    act_param = 0.01
    batch = 1024   # v7x: 2 x 512 grid steps (one per TC); v5e/v6e: 1 x 1024

    key = jax.random.PRNGKey(0)
    key, kx = jax.random.split(key)
    x = jax.random.normal(kx, (batch, input_size), jnp.float32)

    weights, biases = init_dense_module_params(
        key, num_layers, input_size, output_size, hidden_size)
    w_bf16, b_col = prepare_dense_params(weights, biases)   # host-side, once

    out = dense_module_forward(x, w_bf16, b_col, act_param=act_param)
    out = jax.block_until_ready(out)
    assert out.shape == (batch, output_size)

    # Tight check vs. a JAX reference with identical bf16-matmul precision.
    ref_bf16 = reference_forward(x, weights, biases, act_param,
                                 matmul_dtype=jnp.bfloat16)
    assert jnp.allclose(out, ref_bf16, atol=2e-3, rtol=2e-3)

    # Loose check vs. the full-f32 reference (kernel matmuls are bf16 on the
    # MXU; the original PyTorch module is f64 — see TODO in the kernel).
    ref_f32 = reference_forward(x, weights, biases, act_param)
    assert jnp.allclose(out, ref_f32, atol=1e-1, rtol=1e-1)

    # Exercise the ragged-batch path (lane dim padded up to a multiple of 256).
    out_small = dense_module_forward(x[:100], w_bf16, b_col,
                                     act_param=act_param)
    out_small = jax.block_until_ready(out_small)
    assert out_small.shape == (100, output_size)
    assert jnp.allclose(out_small, ref_bf16[:100], atol=2e-3, rtol=2e-3)

    print("KERNEL_OK")
</pallas_src>

<mosaic_0001>
module attributes {stable_mosaic.version = 11 : i64} {
  func.func @_dense_mlp_kernel(%arg0: i32, %arg1: memref<1024x16xf32, #tpu.memory_space<vmem>>, %arg2: memref<32x16xbf16, #tpu.memory_space<vmem>>, %arg3: memref<32x1xf32, #tpu.memory_space<vmem>>, %arg4: memref<32x32xbf16, #tpu.memory_space<vmem>>, %arg5: memref<32x1xf32, #tpu.memory_space<vmem>>, %arg6: memref<8x32xbf16, #tpu.memory_space<vmem>>, %arg7: memref<8x1xf32, #tpu.memory_space<vmem>>, %arg8: memref<1024x8xf32, #tpu.memory_space<vmem>>) attributes {dimension_semantics = [#tpu.dimension_semantics<parallel>], iteration_bounds = array<i64: 1>, scalar_prefetch = 0 : i64, scratch_operands = 0 : i64, tpu.core_type = #tpu.core_type<tc>, window_params = [{transform_indices = @transform_0, window_bounds = array<i64: 1024, 16>}, {pipeline_mode = #tpu.pipeline_mode<synchronous>, transform_indices = @transform_1, window_bounds = array<i64: 32, 16>}, {pipeline_mode = #tpu.pipeline_mode<synchronous>, transform_indices = @transform_2, window_bounds = array<i64: 32, 1>}, {pipeline_mode = #tpu.pipeline_mode<synchronous>, transform_indices = @transform_3, window_bounds = array<i64: 32, 32>}, {pipeline_mode = #tpu.pipeline_mode<synchronous>, transform_indices = @transform_4, window_bounds = array<i64: 32, 1>}, {pipeline_mode = #tpu.pipeline_mode<synchronous>, transform_indices = @transform_5, window_bounds = array<i64: 8, 32>}, {pipeline_mode = #tpu.pipeline_mode<synchronous>, transform_indices = @transform_6, window_bounds = array<i64: 8, 1>}, {transform_indices = @transform_7, window_bounds = array<i64: 1024, 8>}]} {
    %c0 = arith.constant 0 : index
    %c0_0 = arith.constant 0 : index
    %0 = vector.load %arg1[%c0, %c0_0] : memref<1024x16xf32, #tpu.memory_space<vmem>>, vector<1024x16xf32>
    %1 = arith.truncf %0 : vector<1024x16xf32> to vector<1024x16xbf16>
    %c0_1 = arith.constant 0 : index
    %c0_2 = arith.constant 0 : index
    %2 = vector.load %arg2[%c0_1, %c0_2] : memref<32x16xbf16, #tpu.memory_space<vmem>>, vector<32x16xbf16>
    %c0_3 = arith.constant 0 : index
    %c0_4 = arith.constant 0 : index
    %3 = vector.load %arg3[%c0_3, %c0_4] : memref<32x1xf32, #tpu.memory_space<vmem>>, vector<32x1xf32>
    %cst = arith.constant dense<0.000000e+00> : vector<32x1024xf32>
    %4 = tpu.matmul %2, %1, %cst {dimension_numbers = #tpu.dot_dimension_numbers<[1], [1], [0], [0], [0, 0, 1, 0], [], []>} : vector<32x16xbf16>, vector<1024x16xbf16>, vector<32x1024xf32> -> vector<32x1024xf32>
    %5 = vector.broadcast %3 : vector<32x1xf32> to vector<32x1024xf32>
    %6 = arith.addf %4, %5 : vector<32x1024xf32>
    %cst_5 = arith.constant 0.000000e+00 : f32
    %7 = vector.broadcast %cst_5 : f32 to vector<32x1024xf32>
    %8 = arith.cmpf ogt, %6, %7 : vector<32x1024xf32>
    %cst_6 = arith.constant 0.00999999977 : f32
    %9 = vector.broadcast %cst_6 : f32 to vector<32x1024xf32>
    %10 = arith.mulf %9, %6 : vector<32x1024xf32>
    %11 = arith.select %8, %6, %10 : vector<32x1024xi1>, vector<32x1024xf32>
    %c0_7 = arith.constant 0 : index
    %c0_8 = arith.constant 0 : index
    %12 = vector.load %arg4[%c0_7, %c0_8] : memref<32x32xbf16, #tpu.memory_space<vmem>>, vector<32x32xbf16>
    %c0_9 = arith.constant 0 : index
    %c0_10 = arith.constant 0 : index
    %13 = vector.load %arg5[%c0_9, %c0_10] : memref<32x1xf32, #tpu.memory_space<vmem>>, vector<32x1xf32>
    %14 = arith.truncf %11 : vector<32x1024xf32> to vector<32x1024xbf16>
    %cst_11 = arith.constant dense<0.000000e+00> : vector<32x1024xf32>
    %15 = tpu.matmul %12, %14, %cst_11 {dimension_numbers = #tpu.dot_dimension_numbers<[1], [0], [0], [1], [0, 0, 1, 1], [], []>} : vector<32x32xbf16>, vector<32x1024xbf16>, vector<32x1024xf32> -> vector<32x1024xf32>
    %16 = vector.broadcast %13 : vector<32x1xf32> to vector<32x1024xf32>
    %17 = arith.addf %15, %16 : vector<32x1024xf32>
    %cst_12 = arith.constant 0.000000e+00 : f32
    %18 = vector.broadcast %cst_12 : f32 to vector<32x1024xf32>
    %19 = arith.cmpf ogt, %17, %18 : vector<32x1024xf32>
    %cst_13 = arith.constant 0.00999999977 : f32
    %20 = vector.broadcast %cst_13 : f32 to vector<32x1024xf32>
    %21 = arith.mulf %20, %17 : vector<32x1024xf32>
    %22 = arith.select %19, %17, %21 : vector<32x1024xi1>, vector<32x1024xf32>
    %c0_14 = arith.constant 0 : index
    %c0_15 = arith.constant 0 : index
    %23 = vector.load %arg6[%c0_14, %c0_15] : memref<8x32xbf16, #tpu.memory_space<vmem>>, vector<8x32xbf16>
    %c0_16 = arith.constant 0 : index
    %c0_17 = arith.constant 0 : index
    %24 = vector.load %arg7[%c0_16, %c0_17] : memref<8x1xf32, #tpu.memory_space<vmem>>, vector<8x1xf32>
    %25 = arith.truncf %22 : vector<32x1024xf32> to vector<32x1024xbf16>
    %cst_18 = arith.constant dense<0.000000e+00> : vector<8x1024xf32>
    %26 = tpu.matmul %23, %25, %cst_18 {dimension_numbers = #tpu.dot_dimension_numbers<[1], [0], [0], [1], [0, 0, 1, 1], [], []>} : vector<8x32xbf16>, vector<32x1024xbf16>, vector<8x1024xf32> -> vector<8x1024xf32>
    %27 = vector.broadcast %24 : vector<8x1xf32> to vector<8x1024xf32>
    %28 = arith.addf %26, %27 : vector<8x1024xf32>
    %29 = tpu.transpose %28, [1, 0] : vector<8x1024xf32> -> vector<1024x8xf32>
    %c0_19 = arith.constant 0 : index
    %c0_20 = arith.constant 0 : index
    %30 = vector.load %arg8[%c0_19, %c0_20] : memref<1024x8xf32, #tpu.memory_space<vmem>>, vector<1024x8xf32>
    tpu.vector_store %arg8[%c0_19, %c0_20], %29 {strides = array<i32>} : memref<1024x8xf32, #tpu.memory_space<vmem>>, vector<1024x8xf32>,
    return
  }
  func.func @transform_0(%arg0: i32) -> (i32, i32) {
    %c0_i32 = arith.constant 0 : i32
    %c0_i32_0 = arith.constant 0 : i32
    return %arg0, %c0_i32 : i32, i32
  }
  func.func @transform_1(%arg0: i32) -> (i32, i32) {
    %c0_i32 = arith.constant 0 : i32
    %c0_i32_0 = arith.constant 0 : i32
    %c0_i32_1 = arith.constant 0 : i32
    return %c0_i32, %c0_i32_0 : i32, i32
  }
  func.func @transform_2(%arg0: i32) -> (i32, i32) {
    %c0_i32 = arith.constant 0 : i32
    %c0_i32_0 = arith.constant 0 : i32
    %c0_i32_1 = arith.constant 0 : i32
    return %c0_i32, %c0_i32_0 : i32, i32
  }
  func.func @transform_3(%arg0: i32) -> (i32, i32) {
    %c0_i32 = arith.constant 0 : i32
    %c0_i32_0 = arith.constant 0 : i32
    %c0_i32_1 = arith.constant 0 : i32
    return %c0_i32, %c0_i32_0 : i32, i32
  }
  func.func @transform_4(%arg0: i32) -> (i32, i32) {
    %c0_i32 = arith.constant 0 : i32
    %c0_i32_0 = arith.constant 0 : i32
    %c0_i32_1 = arith.constant 0 : i32
    return %c0_i32, %c0_i32_0 : i32, i32
  }
  func.func @transform_5(%arg0: i32) -> (i32, i32) {
    %c0_i32 = arith.constant 0 : i32
    %c0_i32_0 = arith.constant 0 : i32
    %c0_i32_1 = arith.constant 0 : i32
    return %c0_i32, %c0_i32_0 : i32, i32
  }
  func.func @transform_6(%arg0: i32) -> (i32, i32) {
    %c0_i32 = arith.constant 0 : i32
    %c0_i32_0 = arith.constant 0 : i32
    %c0_i32_1 = arith.constant 0 : i32
    return %c0_i32, %c0_i32_0 : i32, i32
  }
  func.func @transform_7(%arg0: i32) -> (i32, i32) {
    %c0_i32 = arith.constant 0 : i32
    %c0_i32_0 = arith.constant 0 : i32
    return %arg0, %c0_i32 : i32, i32
  }
}

</mosaic_0001>

<llo_original>
// kernel: tpu_custom_call.1
$region0: #{tpu_custom_call.1}
  #allocation0 [shape = 'u32[]', space=smem, size = 0x4, offset = 0x4, fixed_abs, tag = 'smem constant byte address 0x4 - core index']
  #allocation1 [shape = 'u32[144,128]{1,0:T(1,128)}', space=vmem, size = 0x12000, scoped, tag = 'internal scratch']
  %s0 = inlined_call_operand.vmem [shape: f32[1024,16], index: 0, kind: input, shape index: {}]
  %s1 = inlined_call_operand.vmem [shape: bf16[32,16], index: 1, kind: input, shape index: {}]
  %s2 = inlined_call_operand.vmem [shape: f32[32,1], index: 2, kind: input, shape index: {}]
  %s3 = inlined_call_operand.vmem [shape: bf16[32,32], index: 3, kind: input, shape index: {}]
  %s4 = inlined_call_operand.vmem [shape: f32[32,1], index: 4, kind: input, shape index: {}]
  %s5 = inlined_call_operand.vmem [shape: bf16[8,32], index: 5, kind: input, shape index: {}]
  %s6 = inlined_call_operand.vmem [shape: f32[8,1], index: 6, kind: input, shape index: {}]
  %s7 = inlined_call_operand.vmem [shape: f32[1024,8], index: 7, kind: output, shape index: {}]
  %s8 = sld [smem:[#allocation0]]
  $region38: #{tpu_custom_call.1} parent=0
    _
  %s10 = ssub.s32 1, %s8
  %s11 = scalar_select 0, %s10, %s8
  // Predicated region
  $region2: #{tpu_custom_call.1} parent=0 // pred_check
    _
  $region3: #{tpu_custom_call.1} parent=0 // pred_check_branch
    %13 = sbr.rel (0) target = $region5
  $region4: #{tpu_custom_call.1} parent=0 // pred_region
    _
  $region5: #{tpu_custom_call.1} parent=0 // pred_fallthru
    _
  // Predicated region
  $region6: #{tpu_custom_call.1} parent=0 // pred_check
    _
  $region7: #{tpu_custom_call.1} parent=0 // pred_check_branch
    %15 = sbr.rel (0) target = $region9
  $region8: #{tpu_custom_call.1} parent=0 // pred_region
    _
  $region9: #{tpu_custom_call.1} parent=0 // pred_fallthru
    _
  // Predicated region
  $region10: #{tpu_custom_call.1} parent=0 // pred_check
    _
  $region11: #{tpu_custom_call.1} parent=0 // pred_check_branch
    %17 = sbr.rel (0) target = $region13
  $region12: #{tpu_custom_call.1} parent=0 // pred_region
    _
  $region13: #{tpu_custom_call.1} parent=0 // pred_fallthru
    _
  // Predicated region
  $region14: #{tpu_custom_call.1} parent=0 // pred_check
    _
  $region15: #{tpu_custom_call.1} parent=0 // pred_check_branch
    %19 = sbr.rel (0) target = $region17
  $region16: #{tpu_custom_call.1} parent=0 // pred_region
    _
  $region17: #{tpu_custom_call.1} parent=0 // pred_fallthru
    _
  // Predicated region
  $region18: #{tpu_custom_call.1} parent=0 // pred_check
    _
  $region19: #{tpu_custom_call.1} parent=0 // pred_check_branch
    %21 = sbr.rel (0) target = $region21
  $region20: #{tpu_custom_call.1} parent=0 // pred_region
    _
  $region21: #{tpu_custom_call.1} parent=0 // pred_fallthru
    _
  // Predicated region
  $region22: #{tpu_custom_call.1} parent=0 // pred_check
    _
  $region23: #{tpu_custom_call.1} parent=0 // pred_check_branch
    %23 = sbr.rel (0) target = $region25
  $region24: #{tpu_custom_call.1} parent=0 // pred_region
    _
  $region25: #{tpu_custom_call.1} parent=0 // pred_fallthru
    _
  // Predicated region
  $region26: #{tpu_custom_call.1} parent=0 // pred_check
    _
  $region27: #{tpu_custom_call.1} parent=0 // pred_check_branch
    %25 = sbr.rel (0) target = $region29
  $region28: #{tpu_custom_call.1} parent=0 // pred_region
    _
  $region29: #{tpu_custom_call.1} parent=0 // pred_fallthru
    _
  %v27 = vld [vmem:[%s0] sm:$0xff]
  %v28 = vld [vmem:[%s0 + $0x8] sm:$0xff]
  %v29 = vld [vmem:[%s0 + $0x10] sm:$0xff]
  %v30 = vld [vmem:[%s0 + $0x18] sm:$0xff]
  %v31 = vld [vmem:[%s0 + $0x20] sm:$0xff]
  %v32 = vld [vmem:[%s0 + $0x28] sm:$0xff]
  %v33 = vld [vmem:[%s0 + $0x30] sm:$0xff]
  %v34 = vld [vmem:[%s0 + $0x38] sm:$0xff]
  %v35 = vld [vmem:[%s0 + $0x40] sm:$0xff]
  %v36 = vld [vmem:[%s0 + $0x48] sm:$0xff]
  %v37 = vld [vmem:[%s0 + $0x50] sm:$0xff]
  %v38 = vld [vmem:[%s0 + $0x58] sm:$0xff]
  %v39 = vld [vmem:[%s0 + $0x60] sm:$0xff]
  %v40 = vld [vmem:[%s0 + $0x68] sm:$0xff]
  %v41 = vld [vmem:[%s0 + $0x70] sm:$0xff]
  %v42 = vld [vmem:[%s0 + $0x78] sm:$0xff]
  %v43 = vld [vmem:[%s0 + $0x80] sm:$0xff]
  %v44 = vld [vmem:[%s0 + $0x88] sm:$0xff]
  %v45 = vld [vmem:[%s0 + $0x90] sm:$0xff]
  %v46 = vld [vmem:[%s0 + $0x98] sm:$0xff]
  %v47 = vld [vmem:[%s0 + $0xa0] sm:$0xff]
  %v48 = vld [vmem:[%s0 + $0xa8] sm:$0xff]
  %v49 = vld [vmem:[%s0 + $0xb0] sm:$0xff]
  %v50 = vld [vmem:[%s0 + $0xb8] sm:$0xff]
  %v51 = vld [vmem:[%s0 + $0xc0] sm:$0xff]
  %v52 = vld [vmem:[%s0 + $0xc8] sm:$0xff]
  %v53 = vld [vmem:[%s0 + $0xd0] sm:$0xff]
  %v54 = vld [vmem:[%s0 + $0xd8] sm:$0xff]
  %v55 = vld [vmem:[%s0 + $0xe0] sm:$0xff]
  %v56 = vld [vmem:[%s0 + $0xe8] sm:$0xff]
  %v57 = vld [vmem:[%s0 + $0xf0] sm:$0xff]
  %v58 = vld [vmem:[%s0 + $0xf8] sm:$0xff]
  %v59 = vld [vmem:[%s0 + $0x100] sm:$0xff]
  %v60 = vld [vmem:[%s0 + $0x108] sm:$0xff]
  %v61 = vld [vmem:[%s0 + $0x110] sm:$0xff]
  %v62 = vld [vmem:[%s0 + $0x118] sm:$0xff]
  %v63 = vld [vmem:[%s0 + $0x120] sm:$0xff]
  %v64 = vld [vmem:[%s0 + $0x128] sm:$0xff]
  %v65 = vld [vmem:[%s0 + $0x130] sm:$0xff]
  %v66 = vld [vmem:[%s0 + $0x138] sm:$0xff]
  %v67 = vld [vmem:[%s0 + $0x140] sm:$0xff]
  %v68 = vld [vmem:[%s0 + $0x148] sm:$0xff]
  %v69 = vld [vmem:[%s0 + $0x150] sm:$0xff]
  %v70 = vld [vmem:[%s0 + $0x158] sm:$0xff]
  %v71 = vld [vmem:[%s0 + $0x160] sm:$0xff]
  %v72 = vld [vmem:[%s0 + $0x168] sm:$0xff]
  %v73 = vld [vmem:[%s0 + $0x170] sm:$0xff]
  %v74 = vld [vmem:[%s0 + $0x178] sm:$0xff]
  %v75 = vld [vmem:[%s0 + $0x180] sm:$0xff]
  %v76 = vld [vmem:[%s0 + $0x188] sm:$0xff]
  %v77 = vld [vmem:[%s0 + $0x190] sm:$0xff]
  %v78 = vld [vmem:[%s0 + $0x198] sm:$0xff]
  %v79 = vld [vmem:[%s0 + $0x1a0] sm:$0xff]
  %v80 = vld [vmem:[%s0 + $0x1a8] sm:$0xff]
  %v81 = vld [vmem:[%s0 + $0x1b0] sm:$0xff]
  %v82 = vld [vmem:[%s0 + $0x1b8] sm:$0xff]
  %v83 = vld [vmem:[%s0 + $0x1c0] sm:$0xff]
  %v84 = vld [vmem:[%s0 + $0x1c8] sm:$0xff]
  %v85 = vld [vmem:[%s0 + $0x1d0] sm:$0xff]
  %v86 = vld [vmem:[%s0 + $0x1d8] sm:$0xff]
  %v87 = vld [vmem:[%s0 + $0x1e0] sm:$0xff]
  %v88 = vld [vmem:[%s0 + $0x1e8] sm:$0xff]
  %v89 = vld [vmem:[%s0 + $0x1f0] sm:$0xff]
  %v90 = vld [vmem:[%s0 + $0x1f8] sm:$0xff]
  %v91 = vld [vmem:[%s0 + $0x200] sm:$0xff]
  %v92 = vld [vmem:[%s0 + $0x208] sm:$0xff]
  %v93 = vld [vmem:[%s0 + $0x210] sm:$0xff]
  %v94 = vld [vmem:[%s0 + $0x218] sm:$0xff]
  %v95 = vld [vmem:[%s0 + $0x220] sm:$0xff]
  %v96 = vld [vmem:[%s0 + $0x228] sm:$0xff]
  %v97 = vld [vmem:[%s0 + $0x230] sm:$0xff]
  %v98 = vld [vmem:[%s0 + $0x238] sm:$0xff]
  %v99 = vld [vmem:[%s0 + $0x240] sm:$0xff]
  %v100 = vld [vmem:[%s0 + $0x248] sm:$0xff]
  %v101 = vld [vmem:[%s0 + $0x250] sm:$0xff]
  %v102 = vld [vmem:[%s0 + $0x258] sm:$0xff]
  %v103 = vld [vmem:[%s0 + $0x260] sm:$0xff]
  %v104 = vld [vmem:[%s0 + $0x268] sm:$0xff]
  %v105 = vld [vmem:[%s0 + $0x270] sm:$0xff]
  %v106 = vld [vmem:[%s0 + $0x278] sm:$0xff]
  %v107 = vld [vmem:[%s0 + $0x280] sm:$0xff]
  %v108 = vld [vmem:[%s0 + $0x288] sm:$0xff]
  %v109 = vld [vmem:[%s0 + $0x290] sm:$0xff]
  %v110 = vld [vmem:[%s0 + $0x298] sm:$0xff]
  %v111 = vld [vmem:[%s0 + $0x2a0] sm:$0xff]
  %v112 = vld [vmem:[%s0 + $0x2a8] sm:$0xff]
  %v113 = vld [vmem:[%s0 + $0x2b0] sm:$0xff]
  %v114 = vld [vmem:[%s0 + $0x2b8] sm:$0xff]
  %v115 = vld [vmem:[%s0 + $0x2c0] sm:$0xff]
  %v116 = vld [vmem:[%s0 + $0x2c8] sm:$0xff]
  %v117 = vld [vmem:[%s0 + $0x2d0] sm:$0xff]
  %v118 = vld [vmem:[%s0 + $0x2d8] sm:$0xff]
  %v119 = vld [vmem:[%s0 + $0x2e0] sm:$0xff]
  %v120 = vld [vmem:[%s0 + $0x2e8] sm:$0xff]
  %v121 = vld [vmem:[%s0 + $0x2f0] sm:$0xff]
  %v122 = vld [vmem:[%s0 + $0x2f8] sm:$0xff]
  %v123 = vld [vmem:[%s0 + $0x300] sm:$0xff]
  %v124 = vld [vmem:[%s0 + $0x308] sm:$0xff]
  %v125 = vld [vmem:[%s0 + $0x310] sm:$0xff]
  %v126 = vld [vmem:[%s0 + $0x318] sm:$0xff]
  %v127 = vld [vmem:[%s0 + $0x320] sm:$0xff]
  %v128 = vld [vmem:[%s0 + $0x328] sm:$0xff]
  %v129 = vld [vmem:[%s0 + $0x330] sm:$0xff]
  %v130 = vld [vmem:[%s0 + $0x338] sm:$0xff]
  %v131 = vld [vmem:[%s0 + $0x340] sm:$0xff]
  %v132 = vld [vmem:[%s0 + $0x348] sm:$0xff]
  %v133 = vld [vmem:[%s0 + $0x350] sm:$0xff]
  %v134 = vld [vmem:[%s0 + $0x358] sm:$0xff]
  %v135 = vld [vmem:[%s0 + $0x360] sm:$0xff]
  %v136 = vld [vmem:[%s0 + $0x368] sm:$0xff]
  %v137 = vld [vmem:[%s0 + $0x370] sm:$0xff]
  %v138 = vld [vmem:[%s0 + $0x378] sm:$0xff]
  %v139 = vld [vmem:[%s0 + $0x380] sm:$0xff]
  %v140 = vld [vmem:[%s0 + $0x388] sm:$0xff]
  %v141 = vld [vmem:[%s0 + $0x390] sm:$0xff]
  %v142 = vld [vmem:[%s0 + $0x398] sm:$0xff]
  %v143 = vld [vmem:[%s0 + $0x3a0] sm:$0xff]
  %v144 = vld [vmem:[%s0 + $0x3a8] sm:$0xff]
  %v145 = vld [vmem:[%s0 + $0x3b0] sm:$0xff]
  %v146 = vld [vmem:[%s0 + $0x3b8] sm:$0xff]
  %v147 = vld [vmem:[%s0 + $0x3c0] sm:$0xff]
  %v148 = vld [vmem:[%s0 + $0x3c8] sm:$0xff]
  %v149 = vld [vmem:[%s0 + $0x3d0] sm:$0xff]
  %v150 = vld [vmem:[%s0 + $0x3d8] sm:$0xff]
  %v151 = vld [vmem:[%s0 + $0x3e0] sm:$0xff]
  %v152 = vld [vmem:[%s0 + $0x3e8] sm:$0xff]
  %v153 = vld [vmem:[%s0 + $0x3f0] sm:$0xff]
  %v154 = vld [vmem:[%s0 + $0x3f8] sm:$0xff]
  %v155 = vpack.c.bf16 %v28, %v27
  %v156 = vpack.c.bf16 %v30, %v29
  %v157 = vpack.c.bf16 %v32, %v31
  %v158 = vpack.c.bf16 %v34, %v33
  %v159 = vpack.c.bf16 %v36, %v35
  %v160 = vpack.c.bf16 %v38, %v37
  %v161 = vpack.c.bf16 %v40, %v39
  %v162 = vpack.c.bf16 %v42, %v41
  %v163 = vpack.c.bf16 %v44, %v43
  %v164 = vpack.c.bf16 %v46, %v45
  %v165 = vpack.c.bf16 %v48, %v47
  %v166 = vpack.c.bf16 %v50, %v49
  %v167 = vpack.c.bf16 %v52, %v51
  %v168 = vpack.c.bf16 %v54, %v53
  %v169 = vpack.c.bf16 %v56, %v55
  %v170 = vpack.c.bf16 %v58, %v57
  %v171 = vpack.c.bf16 %v60, %v59
  %v172 = vpack.c.bf16 %v62, %v61
  %v173 = vpack.c.bf16 %v64, %v63
  %v174 = vpack.c.bf16 %v66, %v65
  %v175 = vpack.c.bf16 %v68, %v67
  %v176 = vpack.c.bf16 %v70, %v69
  %v177 = vpack.c.bf16 %v72, %v71
  %v178 = vpack.c.bf16 %v74, %v73
  %v179 = vpack.c.bf16 %v76, %v75
  %v180 = vpack.c.bf16 %v78, %v77
  %v181 = vpack.c.bf16 %v80, %v79
  %v182 = vpack.c.bf16 %v82, %v81
  %v183 = vpack.c.bf16 %v84, %v83
  %v184 = vpack.c.bf16 %v86, %v85
  %v185 = vpack.c.bf16 %v88, %v87
  %v186 = vpack.c.bf16 %v90, %v89
  %v187 = vpack.c.bf16 %v92, %v91
  %v188 = vpack.c.bf16 %v94, %v93
  %v189 = vpack.c.bf16 %v96, %v95
  %v190 = vpack.c.bf16 %v98, %v97
  %v191 = vpack.c.bf16 %v100, %v99
  %v192 = vpack.c.bf16 %v102, %v101
  %v193 = vpack.c.bf16 %v104, %v103
  %v194 = vpack.c.bf16 %v106, %v105
  %v195 = vpack.c.bf16 %v108, %v107
  %v196 = vpack.c.bf16 %v110, %v109
  %v197 = vpack.c.bf16 %v112, %v111
  %v198 = vpack.c.bf16 %v114, %v113
  %v199 = vpack.c.bf16 %v116, %v115
  %v200 = vpack.c.bf16 %v118, %v117
  %v201 = vpack.c.bf16 %v120, %v119
  %v202 = vpack.c.bf16 %v122, %v121
  %v203 = vpack.c.bf16 %v124, %v123
  %v204 = vpack.c.bf16 %v126, %v125
  %v205 = vpack.c.bf16 %v128, %v127
  %v206 = vpack.c.bf16 %v130, %v129
  %v207 = vpack.c.bf16 %v132, %v131
  %v208 = vpack.c.bf16 %v134, %v133
  %v209 = vpack.c.bf16 %v136, %v135
  %v210 = vpack.c.bf16 %v138, %v137
  %v211 = vpack.c.bf16 %v140, %v139
  %v212 = vpack.c.bf16 %v142, %v141
  %v213 = vpack.c.bf16 %v144, %v143
  %v214 = vpack.c.bf16 %v146, %v145
  %v215 = vpack.c.bf16 %v148, %v147
  %v216 = vpack.c.bf16 %v150, %v149
  %v217 = vpack.c.bf16 %v152, %v151
  %v218 = vpack.c.bf16 %v154, %v153
  %v219 = vld [vmem:[%s1] sm:$0xf]
  %v220 = vld [vmem:[%s1 + $0x4] sm:$0xf]
  %v221 = vld [vmem:[%s1 + $0x8] sm:$0xf]
  %v222 = vld [vmem:[%s1 + $0xc] sm:$0xf]
  %v223 = vld [vmem:[%s2] sm:$0xff]
  %v224 = vld [vmem:[%s2 + $0x8] sm:$0xff]
  %v225 = vld [vmem:[%s2 + $0x10] sm:$0xff]
  %v226 = vld [vmem:[%s2 + $0x18] sm:$0xff]
  %228 = vset.pattern.permute.xlu0 0
  %229 = vperm.xlu0 %228, %v223
  %v230 = vpop.permute.xlu0 %229
  %233 = vset.pattern.permute.xlu0 0
  %234 = vperm.xlu0 %233, %v224
  %v235 = vpop.permute.xlu0 %234
  %238 = vset.pattern.permute.xlu0 0
  %239 = vperm.xlu0 %238, %v225
  %v240 = vpop.permute.xlu0 %239
  %243 = vset.pattern.permute.xlu0 0
  %244 = vperm.xlu0 %243, %v226
  %v245 = vpop.permute.xlu0 %244
  %v251 = vunpack.c.l.b16 %v219
  %v252 = vunpack.c.l.b16 %v220
  %v253 = vunpack.c.l.b16 %v221
  %v254 = vunpack.c.l.b16 %v222
  %v255 = vpack.c.b16 %v252, %v251
  %v256 = vpack.c.b16 %v254, %v253
  %vm257 = vcmask 130048
  %v259 = vsel %vm257, %v255, 0
  %v262 = vsel %vm257, %v256, 0
  %v265 = vsel %vm257, %v155, 0
  %v268 = vsel %vm257, %v156, 0
  %v271 = vsel %vm257, %v157, 0
  %v274 = vsel %vm257, %v158, 0
  %v277 = vsel %vm257, %v159, 0
  %v280 = vsel %vm257, %v160, 0
  %v283 = vsel %vm257, %v161, 0
  %v286 = vsel %vm257, %v162, 0
  %v289 = vsel %vm257, %v163, 0
  %v292 = vsel %vm257, %v164, 0
  %v295 = vsel %vm257, %v165, 0
  %v298 = vsel %vm257, %v166, 0
  %v301 = vsel %vm257, %v167, 0
  %v304 = vsel %vm257, %v168, 0
  %v307 = vsel %vm257, %v169, 0
  %v310 = vsel %vm257, %v170, 0
  %v313 = vsel %vm257, %v171, 0
  %v316 = vsel %vm257, %v172, 0
  %v319 = vsel %vm257, %v173, 0
  %v322 = vsel %vm257, %v174, 0
  %v325 = vsel %vm257, %v175, 0
  %v328 = vsel %vm257, %v176, 0
  %v331 = vsel %vm257, %v177, 0
  %v334 = vsel %vm257, %v178, 0
  %v337 = vsel %vm257, %v179, 0
  %v340 = vsel %vm257, %v180, 0
  %v343 = vsel %vm257, %v181, 0
  %v346 = vsel %vm257, %v182, 0
  %v349 = vsel %vm257, %v183, 0
  %v352 = vsel %vm257, %v184, 0
  %v355 = vsel %vm257, %v185, 0
  %v358 = vsel %vm257, %v186, 0
  %v361 = vsel %vm257, %v187, 0
  %v364 = vsel %vm257, %v188, 0
  %v367 = vsel %vm257, %v189, 0
  %v370 = vsel %vm257, %v190, 0
  %v373 = vsel %vm257, %v191, 0
  %v376 = vsel %vm257, %v192, 0
  %v379 = vsel %vm257, %v193, 0
  %v382 = vsel %vm257, %v194, 0
  %v385 = vsel %vm257, %v195, 0
  %v388 = vsel %vm257, %v196, 0
  %v391 = vsel %vm257, %v197, 0
  %v394 = vsel %vm257, %v198, 0
  %v397 = vsel %vm257, %v199, 0
  %v400 = vsel %vm257, %v200, 0
  %v403 = vsel %vm257, %v201, 0
  %v406 = vsel %vm257, %v202, 0
  %v409 = vsel %vm257, %v203, 0
  %v412 = vsel %vm257, %v204, 0
  %v415 = vsel %vm257, %v205, 0
  %v418 = vsel %vm257, %v206, 0
  %v421 = vsel %vm257, %v207, 0
  %v424 = vsel %vm257, %v208, 0
  %v427 = vsel %vm257, %v209, 0
  %v430 = vsel %vm257, %v210, 0
  %v433 = vsel %vm257, %v211, 0
  %v436 = vsel %vm257, %v212, 0
  %v439 = vsel %vm257, %v213, 0
  %v442 = vsel %vm257, %v214, 0
  %v445 = vsel %vm257, %v215, 0
  %v448 = vsel %vm257, %v216, 0
  %v451 = vsel %vm257, %v217, 0
  %v454 = vsel %vm257, %v218, 0
  %456 = vmatprep.subr.bf16.mxu0 0
  %457 = vmatpush1.bf16.xpose.msra.mxu0 %v286
  %458 = vmatprep.subr.bf16.mxu0 0
  %459 = vmatpush1.bf16.xpose.msra.mxu0 %v283
  %460 = vmatprep.subr.bf16.mxu0 0
  %461 = vmatpush1.bf16.xpose.msra.mxu0 %v280
  %462 = vmatprep.subr.bf16.mxu0 0
  %463 = vmatpush1.bf16.xpose.msra.mxu0 %v277
  %464 = vmatprep.subr.bf16.mxu0 0
  %465 = vmatpush1.bf16.xpose.msra.mxu0 %v274
  %466 = vmatprep.subr.bf16.mxu0 0
  %467 = vmatpush1.bf16.xpose.msra.mxu0 %v271
  %468 = vmatprep.subr.bf16.mxu0 0
  %469 = vmatpush1.bf16.xpose.msra.mxu0 %v268
  %470 = vmatprep.subr.bf16.mxu0 0
  %471 = vmatpush1.bf16.xpose.msra.mxu0 %v265
  %472 = vmatprep.subr.bf16.mxu0 0
  %473 = vmatpush2.bf16.xpose.msra.mxu0 %v310
  %474 = vmatprep.subr.bf16.mxu0 0
  %475 = vmatpush2.bf16.xpose.msra.mxu0 %v307
  %476 = vmatprep.subr.bf16.mxu0 0
  %477 = vmatpush2.bf16.xpose.msra.mxu0 %v304
  %478 = vmatprep.subr.bf16.mxu0 0
  %479 = vmatpush2.bf16.xpose.msra.mxu0 %v301
  %480 = vmatprep.subr.bf16.mxu0 0
  %481 = vmatpush2.bf16.xpose.msra.mxu0 %v298
  %482 = vmatprep.subr.bf16.mxu0 0
  %483 = vmatpush2.bf16.xpose.msra.mxu0 %v295
  %484 = vmatprep.subr.bf16.mxu0 0
  %485 = vmatpush2.bf16.xpose.msra.mxu0 %v292
  %486 = vmatprep.subr.bf16.mxu0 0
  %487 = vmatpush2.bf16.xpose.msra.mxu0 %v289
  %488 = vmatprep.mubr.bf16.mxu0 0
  %489 = vmatmul.mubr.bf16.gmra.mxu0 %v259
  %v490 = vpop.f32.mrf.mxu0
  %v491 = vadd.f32 %v230, %v490
  %v492 = vpop.f32.mrf.mxu0
  %v493 = vadd.f32 %v230, %v492
  %v494 = vpop.f32.mrf.mxu0
  %v495 = vadd.f32 %v235, %v494
  %v496 = vpop.f32.mrf.mxu0
  %v497 = vadd.f32 %v235, %v496
  %498 = vmatprep.mubr.bf16.mxu0 0
  %499 = vmatmul.mubr.bf16.gmra.mxu0 %v262
  %v500 = vpop.f32.mrf.mxu0
  %v501 = vadd.f32 %v240, %v500
  %v502 = vpop.f32.mrf.mxu0
  %v503 = vadd.f32 %v240, %v502
  %v504 = vpop.f32.mrf.mxu0
  %v505 = vadd.f32 %v245, %v504
  %v506 = vpop.f32.mrf.mxu0
  %v507 = vadd.f32 %v245, %v506
  %508 = vdwg.mxu0
  %509 = vmatprep.subr.bf16.mxu0 0
  %510 = vmatpush1.bf16.xpose.msra.mxu0 %v334
  %511 = vmatprep.subr.bf16.mxu0 0
  %512 = vmatpush1.bf16.xpose.msra.mxu0 %v331
  %513 = vmatprep.subr.bf16.mxu0 0
  %514 = vmatpush1.bf16.xpose.msra.mxu0 %v328
  %515 = vmatprep.subr.bf16.mxu0 0
  %516 = vmatpush1.bf16.xpose.msra.mxu0 %v325
  %517 = vmatprep.subr.bf16.mxu0 0
  %518 = vmatpush1.bf16.xpose.msra.mxu0 %v322
  %519 = vmatprep.subr.bf16.mxu0 0
  %520 = vmatpush1.bf16.xpose.msra.mxu0 %v319
  %521 = vmatprep.subr.bf16.mxu0 0
  %522 = vmatpush1.bf16.xpose.msra.mxu0 %v316
  %523 = vmatprep.subr.bf16.mxu0 0
  %524 = vmatpush1.bf16.xpose.msra.mxu0 %v313
  %525 = vmatprep.subr.bf16.mxu0 0
  %526 = vmatpush2.bf16.xpose.msra.mxu0 %v358
  %527 = vmatprep.subr.bf16.mxu0 0
  %528 = vmatpush2.bf16.xpose.msra.mxu0 %v355
  %529 = vmatprep.subr.bf16.mxu0 0
  %530 = vmatpush2.bf16.xpose.msra.mxu0 %v352
  %531 = vmatprep.subr.bf16.mxu0 0
  %532 = vmatpush2.bf16.xpose.msra.mxu0 %v349
  %533 = vmatprep.subr.bf16.mxu0 0
  %534 = vmatpush2.bf16.xpose.msra.mxu0 %v346
  %535 = vmatprep.subr.bf16.mxu0 0
  %536 = vmatpush2.bf16.xpose.msra.mxu0 %v343
  %537 = vmatprep.subr.bf16.mxu0 0
  %538 = vmatpush2.bf16.xpose.msra.mxu0 %v340
  %539 = vmatprep.subr.bf16.mxu0 0
  %540 = vmatpush2.bf16.xpose.msra.mxu0 %v337
  %541 = vmatprep.mubr.bf16.mxu0 0
  %542 = vmatmul.mubr.bf16.gmra.mxu0 %v259
  %v543 = vpop.f32.mrf.mxu0
  %v544 = vadd.f32 %v230, %v543
  %v545 = vpop.f32.mrf.mxu0
  %v546 = vadd.f32 %v230, %v545
  %v547 = vpop.f32.mrf.mxu0
  %v548 = vadd.f32 %v235, %v547
  %v549 = vpop.f32.mrf.mxu0
  %v550 = vadd.f32 %v235, %v549
  %551 = vmatprep.mubr.bf16.mxu0 0
  %552 = vmatmul.mubr.bf16.gmra.mxu0 %v262
  %v553 = vpop.f32.mrf.mxu0
  %v554 = vadd.f32 %v240, %v553
  %v555 = vpop.f32.mrf.mxu0
  %v556 = vadd.f32 %v240, %v555
  %v557 = vpop.f32.mrf.mxu0
  %v558 = vadd.f32 %v245, %v557
  %v559 = vpop.f32.mrf.mxu0
  %v560 = vadd.f32 %v245, %v559
  %561 = vdwg.mxu0
  %562 = vmatprep.subr.bf16.mxu0 0
  %563 = vmatpush1.bf16.xpose.msra.mxu0 %v382
  %564 = vmatprep.subr.bf16.mxu0 0
  %565 = vmatpush1.bf16.xpose.msra.mxu0 %v379
  %566 = vmatprep.subr.bf16.mxu0 0
  %567 = vmatpush1.bf16.xpose.msra.mxu0 %v376
  %568 = vmatprep.subr.bf16.mxu0 0
  %569 = vmatpush1.bf16.xpose.msra.mxu0 %v373
  %570 = vmatprep.subr.bf16.mxu0 0
  %571 = vmatpush1.bf16.xpose.msra.mxu0 %v370
  %572 = vmatprep.subr.bf16.mxu0 0
  %573 = vmatpush1.bf16.xpose.msra.mxu0 %v367
  %574 = vmatprep.subr.bf16.mxu0 0
  %575 = vmatpush1.bf16.xpose.msra.mxu0 %v364
  %576 = vmatprep.subr.bf16.mxu0 0
  %577 = vmatpush1.bf16.xpose.msra.mxu0 %v361
  %578 = vmatprep.subr.bf16.mxu0 0
  %579 = vmatpush2.bf16.xpose.msra.mxu0 %v406
  %580 = vmatprep.subr.bf16.mxu0 0
  %581 = vmatpush2.bf16.xpose.msra.mxu0 %v403
  %582 = vmatprep.subr.bf16.mxu0 0
  %583 = vmatpush2.bf16.xpose.msra.mxu0 %v400
  %584 = vmatprep.subr.bf16.mxu0 0
  %585 = vmatpush2.bf16.xpose.msra.mxu0 %v397
  %586 = vmatprep.subr.bf16.mxu0 0
  %587 = vmatpush2.bf16.xpose.msra.mxu0 %v394
  %588 = vmatprep.subr.bf16.mxu0 0
  %589 = vmatpush2.bf16.xpose.msra.mxu0 %v391
  %590 = vmatprep.subr.bf16.mxu0 0
  %591 = vmatpush2.bf16.xpose.msra.mxu0 %v388
  %592 = vmatprep.subr.bf16.mxu0 0
  %593 = vmatpush2.bf16.xpose.msra.mxu0 %v385
  %594 = vmatprep.mubr.bf16.mxu0 0
  %595 = vmatmul.mubr.bf16.gmra.mxu0 %v259
  %v596 = vpop.f32.mrf.mxu0
  %v597 = vadd.f32 %v230, %v596
  %v598 = vpop.f32.mrf.mxu0
  %v599 = vadd.f32 %v230, %v598
  %v600 = vpop.f32.mrf.mxu0
  %v601 = vadd.f32 %v235, %v600
  %v602 = vpop.f32.mrf.mxu0
  %v603 = vadd.f32 %v235, %v602
  %604 = vmatprep.mubr.bf16.mxu0 0
  %605 = vmatmul.mubr.bf16.gmra.mxu0 %v262
  %v606 = vpop.f32.mrf.mxu0
  %v607 = vadd.f32 %v240, %v606
  %v608 = vpop.f32.mrf.mxu0
  %v609 = vadd.f32 %v240, %v608
  %v610 = vpop.f32.mrf.mxu0
  %v611 = vadd.f32 %v245, %v610
  %v612 = vpop.f32.mrf.mxu0
  %v613 = vadd.f32 %v245, %v612
  %614 = vdwg.mxu0
  %615 = vmatprep.subr.bf16.mxu0 0
  %616 = vmatpush1.bf16.xpose.msra.mxu0 %v430
  %617 = vmatprep.subr.bf16.mxu0 0
  %618 = vmatpush1.bf16.xpose.msra.mxu0 %v427
  %619 = vmatprep.subr.bf16.mxu0 0
  %620 = vmatpush1.bf16.xpose.msra.mxu0 %v424
  %621 = vmatprep.subr.bf16.mxu0 0
  %622 = vmatpush1.bf16.xpose.msra.mxu0 %v421
  %623 = vmatprep.subr.bf16.mxu0 0
  %624 = vmatpush1.bf16.xpose.msra.mxu0 %v418
  %625 = vmatprep.subr.bf16.mxu0 0
  %626 = vmatpush1.bf16.xpose.msra.mxu0 %v415
  %627 = vmatprep.subr.bf16.mxu0 0
  %628 = vmatpush1.bf16.xpose.msra.mxu0 %v412
  %629 = vmatprep.subr.bf16.mxu0 0
  %630 = vmatpush1.bf16.xpose.msra.mxu0 %v409
  %631 = vmatprep.subr.bf16.mxu0 0
  %632 = vmatpush2.bf16.xpose.msra.mxu0 %v454
  %633 = vmatprep.subr.bf16.mxu0 0
  %634 = vmatpush2.bf16.xpose.msra.mxu0 %v451
  %635 = vmatprep.subr.bf16.mxu0 0
  %636 = vmatpush2.bf16.xpose.msra.mxu0 %v448
  %637 = vmatprep.subr.bf16.mxu0 0
  %638 = vmatpush2.bf16.xpose.msra.mxu0 %v445
  %639 = vmatprep.subr.bf16.mxu0 0
  %640 = vmatpush2.bf16.xpose.msra.mxu0 %v442
  %641 = vmatprep.subr.bf16.mxu0 0
  %642 = vmatpush2.bf16.xpose.msra.mxu0 %v439
  %643 = vmatprep.subr.bf16.mxu0 0
  %644 = vmatpush2.bf16.xpose.msra.mxu0 %v436
  %645 = vmatprep.subr.bf16.mxu0 0
  %646 = vmatpush2.bf16.xpose.msra.mxu0 %v433
  %647 = vmatprep.mubr.bf16.mxu0 0
  %648 = vmatmul.mubr.bf16.gmra.mxu0 %v259
  %v649 = vpop.f32.mrf.mxu0
  %v650 = vadd.f32 %v230, %v649
  %v651 = vpop.f32.mrf.mxu0
  %v652 = vadd.f32 %v230, %v651
  %v653 = vpop.f32.mrf.mxu0
  %v654 = vadd.f32 %v235, %v653
  %v655 = vpop.f32.mrf.mxu0
  %v656 = vadd.f32 %v235, %v655
  %657 = vmatprep.mubr.bf16.mxu0 0
  %658 = vmatmul.mubr.bf16.gmra.mxu0 %v262
  %v659 = vpop.f32.mrf.mxu0
  %v660 = vadd.f32 %v240, %v659
  %v661 = vpop.f32.mrf.mxu0
  %v662 = vadd.f32 %v240, %v661
  %v663 = vpop.f32.mrf.mxu0
  %v664 = vadd.f32 %v245, %v663
  %v665 = vpop.f32.mrf.mxu0
  %v666 = vadd.f32 %v245, %v665
  %667 = vdwg.mxu0
  %vm668 = vcmp.gt.f32.partialorder %v491, 0.0
  %vm669 = vcmp.gt.f32.partialorder %v493, 0.0
  %vm670 = vcmp.gt.f32.partialorder %v544, 0.0
  %vm671 = vcmp.gt.f32.partialorder %v546, 0.0
  %vm672 = vcmp.gt.f32.partialorder %v597, 0.0
  %vm673 = vcmp.gt.f32.partialorder %v599, 0.0
  %vm674 = vcmp.gt.f32.partialorder %v650, 0.0
  %vm675 = vcmp.gt.f32.partialorder %v652, 0.0
  %vm676 = vcmp.gt.f32.partialorder %v495, 0.0
  %vm677 = vcmp.gt.f32.partialorder %v497, 0.0
  %vm678 = vcmp.gt.f32.partialorder %v548, 0.0
  %vm679 = vcmp.gt.f32.partialorder %v550, 0.0
  %vm680 = vcmp.gt.f32.partialorder %v601, 0.0
  %vm681 = vcmp.gt.f32.partialorder %v603, 0.0
  %vm682 = vcmp.gt.f32.partialorder %v654, 0.0
  %vm683 = vcmp.gt.f32.partialorder %v656, 0.0
  %vm684 = vcmp.gt.f32.partialorder %v501, 0.0
  %vm685 = vcmp.gt.f32.partialorder %v503, 0.0
  %vm686 = vcmp.gt.f32.partialorder %v554, 0.0
  %vm687 = vcmp.gt.f32.partialorder %v556, 0.0
  %vm688 = vcmp.gt.f32.partialorder %v607, 0.0
  %vm689 = vcmp.gt.f32.partialorder %v609, 0.0
  %vm690 = vcmp.gt.f32.partialorder %v660, 0.0
  %vm691 = vcmp.gt.f32.partialorder %v662, 0.0
  %vm692 = vcmp.gt.f32.partialorder %v505, 0.0
  %vm693 = vcmp.gt.f32.partialorder %v507, 0.0
  %vm694 = vcmp.gt.f32.partialorder %v558, 0.0
  %vm695 = vcmp.gt.f32.partialorder %v560, 0.0
  %vm696 = vcmp.gt.f32.partialorder %v611, 0.0
  %vm697 = vcmp.gt.f32.partialorder %v613, 0.0
  %vm698 = vcmp.gt.f32.partialorder %v664, 0.0
  %vm699 = vcmp.gt.f32.partialorder %v666, 0.0
  %v700 = vmul.f32 %v491, 0.01
  %v701 = vmul.f32 %v493, 0.01
  %v702 = vmul.f32 %v544, 0.01
  %v703 = vmul.f32 %v546, 0.01
  %v704 = vmul.f32 %v597, 0.01
  %v705 = vmul.f32 %v599, 0.01
  %v706 = vmul.f32 %v650, 0.01
  %v707 = vmul.f32 %v652, 0.01
  %v708 = vmul.f32 %v495, 0.01
  %v709 = vmul.f32 %v497, 0.01
  %v710 = vmul.f32 %v548, 0.01
  %v711 = vmul.f32 %v550, 0.01
  %v712 = vmul.f32 %v601, 0.01
  %v713 = vmul.f32 %v603, 0.01
  %v714 = vmul.f32 %v654, 0.01
  %v715 = vmul.f32 %v656, 0.01
  %v716 = vmul.f32 %v501, 0.01
  %v717 = vmul.f32 %v503, 0.01
  %v718 = vmul.f32 %v554, 0.01
  %v719 = vmul.f32 %v556, 0.01
  %v720 = vmul.f32 %v607, 0.01
  %v721 = vmul.f32 %v609, 0.01
  %v722 = vmul.f32 %v660, 0.01
  %v723 = vmul.f32 %v662, 0.01
  %v724 = vmul.f32 %v505, 0.01
  %v725 = vmul.f32 %v507, 0.01
  %v726 = vmul.f32 %v558, 0.01
  %v727 = vmul.f32 %v560, 0.01
  %v728 = vmul.f32 %v611, 0.01
  %v729 = vmul.f32 %v613, 0.01
  %v730 = vmul.f32 %v664, 0.01
  %v731 = vmul.f32 %v666, 0.01
  %v732 = vsel %vm668, %v491, %v700
  %v733 = vsel %vm669, %v493, %v701
  %v734 = vsel %vm670, %v544, %v702
  %v735 = vsel %vm671, %v546, %v703
  %v736 = vsel %vm672, %v597, %v704
  %v737 = vsel %vm673, %v599, %v705
  %v738 = vsel %vm674, %v650, %v706
  %v739 = vsel %vm675, %v652, %v707
  %v740 = vsel %vm676, %v495, %v708
  %v741 = vsel %vm677, %v497, %v709
  %v742 = vsel %vm678, %v548, %v710
  %v743 = vsel %vm679, %v550, %v711
  %v744 = vsel %vm680, %v601, %v712
  %v745 = vsel %vm681, %v603, %v713
  %v746 = vsel %vm682, %v654, %v714
  %v747 = vsel %vm683, %v656, %v715
  %v748 = vsel %vm684, %v501, %v716
  %v749 = vsel %vm685, %v503, %v717
  %v750 = vsel %vm686, %v554, %v718
  %v751 = vsel %vm687, %v556, %v719
  %v752 = vsel %vm688, %v607, %v720
  %v753 = vsel %vm689, %v609, %v721
  %v754 = vsel %vm690, %v660, %v722
  %v755 = vsel %vm691, %v662, %v723
  %v756 = vsel %vm692, %v505, %v724
  %v757 = vsel %vm693, %v507, %v725
  %v758 = vsel %vm694, %v558, %v726
  %v759 = vsel %vm695, %v560, %v727
  %v760 = vsel %vm696, %v611, %v728
  %v761 = vsel %vm697, %v613, %v729
  %v762 = vsel %vm698, %v664, %v730
  %v763 = vsel %vm699, %v666, %v731
  %v764 = vld [vmem:[%s3] sm:$0xf]
  %v765 = vld [vmem:[%s3 + $0x4] sm:$0xf]
  %v766 = vld [vmem:[%s3 + $0x8] sm:$0xf]
  %v767 = vld [vmem:[%s3 + $0xc] sm:$0xf]
  %v768 = vld [vmem:[%s4] sm:$0xff]
  %v769 = vld [vmem:[%s4 + $0x8] sm:$0xff]
  %v770 = vld [vmem:[%s4 + $0x10] sm:$0xff]
  %v771 = vld [vmem:[%s4 + $0x18] sm:$0xff]
  %v772 = vpack.c.bf16 %v740, %v732
  %v773 = vpack.c.bf16 %v741, %v733
  %v774 = vpack.c.bf16 %v742, %v734
  %v775 = vpack.c.bf16 %v743, %v735
  %v776 = vpack.c.bf16 %v744, %v736
  %v777 = vpack.c.bf16 %v745, %v737
  %v778 = vpack.c.bf16 %v746, %v738
  %v779 = vpack.c.bf16 %v747, %v739
  %v780 = vpack.c.bf16 %v756, %v748
  %v781 = vpack.c.bf16 %v757, %v749
  %v782 = vpack.c.bf16 %v758, %v750
  %v783 = vpack.c.bf16 %v759, %v751
  %v784 = vpack.c.bf16 %v760, %v752
  %v785 = vpack.c.bf16 %v761, %v753
  %v786 = vpack.c.bf16 %v762, %v754
  %v787 = vpack.c.bf16 %v763, %v755
  %789 = vset.pattern.permute.xlu0 0
  %790 = vperm.xlu0 %789, %v768
  %v791 = vpop.permute.xlu0 %790
  %794 = vset.pattern.permute.xlu0 0
  %795 = vperm.xlu0 %794, %v769
  %v796 = vpop.permute.xlu0 %795
  %799 = vset.pattern.permute.xlu0 0
  %800 = vperm.xlu0 %799, %v770
  %v801 = vpop.permute.xlu0 %800
  %804 = vset.pattern.permute.xlu0 0
  %805 = vperm.xlu0 %804, %v771
  %v806 = vpop.permute.xlu0 %805
  %v812 = vunpack.c.l.b16 %v764
  %v813 = vunpack.c.l.b16 %v765
  %v814 = vunpack.c.l.b16 %v766
  %v815 = vunpack.c.l.b16 %v767
  %v816 = vpack.c.b16 %v813, %v812
  %v817 = vpack.c.b16 %v815, %v814
  %vm818 = vcmask 261120
  %v820 = vsel %vm818, %v816, 0
  %v823 = vsel %vm818, %v817, 0
  %825 = vmatprep.subr.bf16.mxu0 0
  %826 = vmatpush1.bf16.msra.mxu0 0
  %827 = vmatprep.subr.bf16.mxu0 0
  %828 = vmatpush1.bf16.msra.mxu0 0
  %829 = vmatprep.subr.bf16.mxu0 0
  %830 = vmatpush1.bf16.msra.mxu0 0
  %831 = vmatprep.subr.bf16.mxu0 0
  %832 = vmatpush1.bf16.msra.mxu0 0
  %833 = vmatprep.subr.bf16.mxu0 0
  %834 = vmatpush1.bf16.msra.mxu0 0
  %835 = vmatprep.subr.bf16.mxu0 0
  %836 = vmatpush1.bf16.msra.mxu0 0
  %837 = vmatprep.subr.bf16.mxu0 %v781
  %838 = vmatpush1.bf16.msra.mxu0 %v780
  %839 = vmatprep.subr.bf16.mxu0 %v773
  %840 = vmatpush1.bf16.msra.mxu0 %v772
  %841 = vmatprep.subr.bf16.mxu0 0
  %842 = vmatpush2.bf16.msra.mxu0 0
  %843 = vmatprep.subr.bf16.mxu0 0
  %844 = vmatpush2.bf16.msra.mxu0 0
  %845 = vmatprep.subr.bf16.mxu0 0
  %846 = vmatpush2.bf16.msra.mxu0 0
  %847 = vmatprep.subr.bf16.mxu0 0
  %848 = vmatpush2.bf16.msra.mxu0 0
  %849 = vmatprep.subr.bf16.mxu0 0
  %850 = vmatpush2.bf16.msra.mxu0 0
  %851 = vmatprep.subr.bf16.mxu0 0
  %852 = vmatpush2.bf16.msra.mxu0 0
  %853 = vmatprep.subr.bf16.mxu0 0
  %854 = vmatpush2.bf16.msra.mxu0 0
  %855 = vmatprep.subr.bf16.mxu0 0
  %856 = vmatpush2.bf16.msra.mxu0 0
  %857 = vmatprep.mubr.bf16.mxu0 0
  %858 = vmatmul.mubr.bf16.gmra.mxu0 %v820
  %v859 = vpop.f32.mrf.mxu0
  %v860 = vadd.f32 %v791, %v859
  %v861 = vpop.f32.mrf.mxu0
  %v862 = vadd.f32 %v791, %v861
  %v863 = vpop.f32.mrf.mxu0
  %v864 = vadd.f32 %v796, %v863
  %v865 = vpop.f32.mrf.mxu0
  %v866 = vadd.f32 %v796, %v865
  %867 = vmatprep.mubr.bf16.mxu0 0
  %868 = vmatmul.mubr.bf16.gmra.mxu0 %v823
  %v869 = vpop.f32.mrf.mxu0
  %v870 = vadd.f32 %v801, %v869
  %v871 = vpop.f32.mrf.mxu0
  %v872 = vadd.f32 %v801, %v871
  %v873 = vpop.f32.mrf.mxu0
  %v874 = vadd.f32 %v806, %v873
  %v875 = vpop.f32.mrf.mxu0
  %v876 = vadd.f32 %v806, %v875
  %877 = vdwg.mxu0
  %878 = vmatprep.subr.bf16.mxu0 0
  %879 = vmatpush1.bf16.msra.mxu0 0
  %880 = vmatprep.subr.bf16.mxu0 0
  %881 = vmatpush1.bf16.msra.mxu0 0
  %882 = vmatprep.subr.bf16.mxu0 0
  %883 = vmatpush1.bf16.msra.mxu0 0
  %884 = vmatprep.subr.bf16.mxu0 0
  %885 = vmatpush1.bf16.msra.mxu0 0
  %886 = vmatprep.subr.bf16.mxu0 0
  %887 = vmatpush1.bf16.msra.mxu0 0
  %888 = vmatprep.subr.bf16.mxu0 0
  %889 = vmatpush1.bf16.msra.mxu0 0
  %890 = vmatprep.subr.bf16.mxu0 %v783
  %891 = vmatpush1.bf16.msra.mxu0 %v782
  %892 = vmatprep.subr.bf16.mxu0 %v775
  %893 = vmatpush1.bf16.msra.mxu0 %v774
  %894 = vmatprep.subr.bf16.mxu0 0
  %895 = vmatpush2.bf16.msra.mxu0 0
  %896 = vmatprep.subr.bf16.mxu0 0
  %897 = vmatpush2.bf16.msra.mxu0 0
  %898 = vmatprep.subr.bf16.mxu0 0
  %899 = vmatpush2.bf16.msra.mxu0 0
  %900 = vmatprep.subr.bf16.mxu0 0
  %901 = vmatpush2.bf16.msra.mxu0 0
  %902 = vmatprep.subr.bf16.mxu0 0
  %903 = vmatpush2.bf16.msra.mxu0 0
  %904 = vmatprep.subr.bf16.mxu0 0
  %905 = vmatpush2.bf16.msra.mxu0 0
  %906 = vmatprep.subr.bf16.mxu0 0
  %907 = vmatpush2.bf16.msra.mxu0 0
  %908 = vmatprep.subr.bf16.mxu0 0
  %909 = vmatpush2.bf16.msra.mxu0 0
  %910 = vmatprep.mubr.bf16.mxu0 0
  %911 = vmatmul.mubr.bf16.gmra.mxu0 %v820
  %v912 = vpop.f32.mrf.mxu0
  %v913 = vadd.f32 %v791, %v912
  %v914 = vpop.f32.mrf.mxu0
  %v915 = vadd.f32 %v791, %v914
  %v916 = vpop.f32.mrf.mxu0
  %v917 = vadd.f32 %v796, %v916
  %v918 = vpop.f32.mrf.mxu0
  %v919 = vadd.f32 %v796, %v918
  %920 = vmatprep.mubr.bf16.mxu0 0
  %921 = vmatmul.mubr.bf16.gmra.mxu0 %v823
  %v922 = vpop.f32.mrf.mxu0
  %v923 = vadd.f32 %v801, %v922
  %v924 = vpop.f32.mrf.mxu0
  %v925 = vadd.f32 %v801, %v924
  %v926 = vpop.f32.mrf.mxu0
  %v927 = vadd.f32 %v806, %v926
  %v928 = vpop.f32.mrf.mxu0
  %v929 = vadd.f32 %v806, %v928
  %930 = vdwg.mxu0
  %931 = vmatprep.subr.bf16.mxu0 0
  %932 = vmatpush1.bf16.msra.mxu0 0
  %933 = vmatprep.subr.bf16.mxu0 0
  %934 = vmatpush1.bf16.msra.mxu0 0
  %935 = vmatprep.subr.bf16.mxu0 0
  %936 = vmatpush1.bf16.msra.mxu0 0
  %937 = vmatprep.subr.bf16.mxu0 0
  %938 = vmatpush1.bf16.msra.mxu0 0
  %939 = vmatprep.subr.bf16.mxu0 0
  %940 = vmatpush1.bf16.msra.mxu0 0
  %941 = vmatprep.subr.bf16.mxu0 0
  %942 = vmatpush1.bf16.msra.mxu0 0
  %943 = vmatprep.subr.bf16.mxu0 %v785
  %944 = vmatpush1.bf16.msra.mxu0 %v784
  %945 = vmatprep.subr.bf16.mxu0 %v777
  %946 = vmatpush1.bf16.msra.mxu0 %v776
  %947 = vmatprep.subr.bf16.mxu0 0
  %948 = vmatpush2.bf16.msra.mxu0 0
  %949 = vmatprep.subr.bf16.mxu0 0
  %950 = vmatpush2.bf16.msra.mxu0 0
  %951 = vmatprep.subr.bf16.mxu0 0
  %952 = vmatpush2.bf16.msra.mxu0 0
  %953 = vmatprep.subr.bf16.mxu0 0
  %954 = vmatpush2.bf16.msra.mxu0 0
  %955 = vmatprep.subr.bf16.mxu0 0
  %956 = vmatpush2.bf16.msra.mxu0 0
  %957 = vmatprep.subr.bf16.mxu0 0
  %958 = vmatpush2.bf16.msra.mxu0 0
  %959 = vmatprep.subr.bf16.mxu0 0
  %960 = vmatpush2.bf16.msra.mxu0 0
  %961 = vmatprep.subr.bf16.mxu0 0
  %962 = vmatpush2.bf16.msra.mxu0 0
  %963 = vmatprep.mubr.bf16.mxu0 0
  %964 = vmatmul.mubr.bf16.gmra.mxu0 %v820
  %v965 = vpop.f32.mrf.mxu0
  %v966 = vadd.f32 %v791, %v965
  %v967 = vpop.f32.mrf.mxu0
  %v968 = vadd.f32 %v791, %v967
  %v969 = vpop.f32.mrf.mxu0
  %v970 = vadd.f32 %v796, %v969
  %v971 = vpop.f32.mrf.mxu0
  %v972 = vadd.f32 %v796, %v971
  %973 = vmatprep.mubr.bf16.mxu0 0
  %974 = vmatmul.mubr.bf16.gmra.mxu0 %v823
  %v975 = vpop.f32.mrf.mxu0
  %v976 = vadd.f32 %v801, %v975
  %v977 = vpop.f32.mrf.mxu0
  %v978 = vadd.f32 %v801, %v977
  %v979 = vpop.f32.mrf.mxu0
  %v980 = vadd.f32 %v806, %v979
  %v981 = vpop.f32.mrf.mxu0
  %v982 = vadd.f32 %v806, %v981
  %983 = vdwg.mxu0
  %984 = vmatprep.subr.bf16.mxu0 0
  %985 = vmatpush1.bf16.msra.mxu0 0
  %986 = vmatprep.subr.bf16.mxu0 0
  %987 = vmatpush1.bf16.msra.mxu0 0
  %988 = vmatprep.subr.bf16.mxu0 0
  %989 = vmatpush1.bf16.msra.mxu0 0
  %990 = vmatprep.subr.bf16.mxu0 0
  %991 = vmatpush1.bf16.msra.mxu0 0
  %992 = vmatprep.subr.bf16.mxu0 0
  %993 = vmatpush1.bf16.msra.mxu0 0
  %994 = vmatprep.subr.bf16.mxu0 0
  %995 = vmatpush1.bf16.msra.mxu0 0
  %996 = vmatprep.subr.bf16.mxu0 %v787
  %997 = vmatpush1.bf16.msra.mxu0 %v786
  %998 = vmatprep.subr.bf16.mxu0 %v779
  %999 = vmatpush1.bf16.msra.mxu0 %v778
  %1000 = vmatprep.subr.bf16.mxu0 0
  %1001 = vmatpush2.bf16.msra.mxu0 0
  %1002 = vmatprep.subr.bf16.mxu0 0
  %1003 = vmatpush2.bf16.msra.mxu0 0
  %1004 = vmatprep.subr.bf16.mxu0 0
  %1005 = vmatpush2.bf16.msra.mxu0 0
  %1006 = vmatprep.subr.bf16.mxu0 0
  %1007 = vmatpush2.bf16.msra.mxu0 0
  %1008 = vmatprep.subr.bf16.mxu0 0
  %1009 = vmatpush2.bf16.msra.mxu0 0
  %1010 = vmatprep.subr.bf16.mxu0 0
  %1011 = vmatpush2.bf16.msra.mxu0 0
  %1012 = vmatprep.subr.bf16.mxu0 0
  %1013 = vmatpush2.bf16.msra.mxu0 0
  %1014 = vmatprep.subr.bf16.mxu0 0
  %1015 = vmatpush2.bf16.msra.mxu0 0
  %1016 = vmatprep.mubr.bf16.mxu0 0
  %1017 = vmatmul.mubr.bf16.gmra.mxu0 %v820
  %v1018 = vpop.f32.mrf.mxu0
  %v1019 = vadd.f32 %v791, %v1018
  %v1020 = vpop.f32.mrf.mxu0
  %v1021 = vadd.f32 %v791, %v1020
  %v1022 = vpop.f32.mrf.mxu0
  %v1023 = vadd.f32 %v796, %v1022
  %v1024 = vpop.f32.mrf.mxu0
  %v1025 = vadd.f32 %v796, %v1024
  %1026 = vmatprep.mubr.bf16.mxu0 0
  %1027 = vmatmul.mubr.bf16.gmra.mxu0 %v823
  %v1028 = vpop.f32.mrf.mxu0
  %v1029 = vadd.f32 %v801, %v1028
  %v1030 = vpop.f32.mrf.mxu0
  %v1031 = vadd.f32 %v801, %v1030
  %v1032 = vpop.f32.mrf.mxu0
  %v1033 = vadd.f32 %v806, %v1032
  %v1034 = vpop.f32.mrf.mxu0
  %v1035 = vadd.f32 %v806, %v1034
  %1036 = vdwg.mxu0
  %vm1037 = vcmp.gt.f32.partialorder %v860, 0.0
  %vm1038 = vcmp.gt.f32.partialorder %v862, 0.0
  %vm1039 = vcmp.gt.f32.partialorder %v913, 0.0
  %vm1040 = vcmp.gt.f32.partialorder %v915, 0.0
  %vm1041 = vcmp.gt.f32.partialorder %v966, 0.0
  %vm1042 = vcmp.gt.f32.partialorder %v968, 0.0
  %vm1043 = vcmp.gt.f32.partialorder %v1019, 0.0
  %vm1044 = vcmp.gt.f32.partialorder %v1021, 0.0
  %vm1045 = vcmp.gt.f32.partialorder %v864, 0.0
  %vm1046 = vcmp.gt.f32.partialorder %v866, 0.0
  %vm1047 = vcmp.gt.f32.partialorder %v917, 0.0
  %vm1048 = vcmp.gt.f32.partialorder %v919, 0.0
  %vm1049 = vcmp.gt.f32.partialorder %v970, 0.0
  %vm1050 = vcmp.gt.f32.partialorder %v972, 0.0
  %vm1051 = vcmp.gt.f32.partialorder %v1023, 0.0
  %vm1052 = vcmp.gt.f32.partialorder %v1025, 0.0
  %vm1053 = vcmp.gt.f32.partialorder %v870, 0.0
  %vm1054 = vcmp.gt.f32.partialorder %v872, 0.0
  %vm1055 = vcmp.gt.f32.partialorder %v923, 0.0
  %vm1056 = vcmp.gt.f32.partialorder %v925, 0.0
  %vm1057 = vcmp.gt.f32.partialorder %v976, 0.0
  %vm1058 = vcmp.gt.f32.partialorder %v978, 0.0
  %vm1059 = vcmp.gt.f32.partialorder %v1029, 0.0
  %vm1060 = vcmp.gt.f32.partialorder %v1031, 0.0
  %vm1061 = vcmp.gt.f32.partialorder %v874, 0.0
  %vm1062 = vcmp.gt.f32.partialorder %v876, 0.0
  %vm1063 = vcmp.gt.f32.partialorder %v927, 0.0
  %vm1064 = vcmp.gt.f32.partialorder %v929, 0.0
  %vm1065 = vcmp.gt.f32.partialorder %v980, 0.0
  %vm1066 = vcmp.gt.f32.partialorder %v982, 0.0
  %vm1067 = vcmp.gt.f32.partialorder %v1033, 0.0
  %vm1068 = vcmp.gt.f32.partialorder %v1035, 0.0
  %v1069 = vmul.f32 %v860, 0.01
  %v1070 = vmul.f32 %v862, 0.01
  %v1071 = vmul.f32 %v913, 0.01
  %v1072 = vmul.f32 %v915, 0.01
  %v1073 = vmul.f32 %v966, 0.01
  %v1074 = vmul.f32 %v968, 0.01
  %v1075 = vmul.f32 %v1019, 0.01
  %v1076 = vmul.f32 %v1021, 0.01
  %v1077 = vmul.f32 %v864, 0.01
  %v1078 = vmul.f32 %v866, 0.01
  %v1079 = vmul.f32 %v917, 0.01
  %v1080 = vmul.f32 %v919, 0.01
  %v1081 = vmul.f32 %v970, 0.01
  %v1082 = vmul.f32 %v972, 0.01
  %v1083 = vmul.f32 %v1023, 0.01
  %v1084 = vmul.f32 %v1025, 0.01
  %v1085 = vmul.f32 %v870, 0.01
  %v1086 = vmul.f32 %v872, 0.01
  %v1087 = vmul.f32 %v923, 0.01
  %v1088 = vmul.f32 %v925, 0.01
  %v1089 = vmul.f32 %v976, 0.01
  %v1090 = vmul.f32 %v978, 0.01
  %v1091 = vmul.f32 %v1029, 0.01
  %v1092 = vmul.f32 %v1031, 0.01
  %v1093 = vmul.f32 %v874, 0.01
  %v1094 = vmul.f32 %v876, 0.01
  %v1095 = vmul.f32 %v927, 0.01
  %v1096 = vmul.f32 %v929, 0.01
  %v1097 = vmul.f32 %v980, 0.01
  %v1098 = vmul.f32 %v982, 0.01
  %v1099 = vmul.f32 %v1033, 0.01
  %v1100 = vmul.f32 %v1035, 0.01
  %v1101 = vsel %vm1037, %v860, %v1069
  %v1102 = vsel %vm1038, %v862, %v1070
  %v1103 = vsel %vm1039, %v913, %v1071
  %v1104 = vsel %vm1040, %v915, %v1072
  %v1105 = vsel %vm1041, %v966, %v1073
  %v1106 = vsel %vm1042, %v968, %v1074
  %v1107 = vsel %vm1043, %v1019, %v1075
  %v1108 = vsel %vm1044, %v1021, %v1076
  %v1109 = vsel %vm1045, %v864, %v1077
  %v1110 = vsel %vm1046, %v866, %v1078
  %v1111 = vsel %vm1047, %v917, %v1079
  %v1112 = vsel %vm1048, %v919, %v1080
  %v1113 = vsel %vm1049, %v970, %v1081
  %v1114 = vsel %vm1050, %v972, %v1082
  %v1115 = vsel %vm1051, %v1023, %v1083
  %v1116 = vsel %vm1052, %v1025, %v1084
  %v1117 = vsel %vm1053, %v870, %v1085
  %v1118 = vsel %vm1054, %v872, %v1086
  %v1119 = vsel %vm1055, %v923, %v1087
  %v1120 = vsel %vm1056, %v925, %v1088
  %v1121 = vsel %vm1057, %v976, %v1089
  %v1122 = vsel %vm1058, %v978, %v1090
  %v1123 = vsel %vm1059, %v1029, %v1091
  %v1124 = vsel %vm1060, %v1031, %v1092
  %v1125 = vsel %vm1061, %v874, %v1093
  %v1126 = vsel %vm1062, %v876, %v1094
  %v1127 = vsel %vm1063, %v927, %v1095
  %v1128 = vsel %vm1064, %v929, %v1096
  %v1129 = vsel %vm1065, %v980, %v1097
  %v1130 = vsel %vm1066, %v982, %v1098
  %v1131 = vsel %vm1067, %v1033, %v1099
  %v1132 = vsel %vm1068, %v1035, %v1100
  %v1133 = vld [vmem:[%s5] sm:$0xf]
  %v1134 = vld [vmem:[%s6] sm:$0xff]
  %v1135 = vpack.c.bf16 %v1109, %v1101
  %v1136 = vpack.c.bf16 %v1110, %v1102
  %v1137 = vpack.c.bf16 %v1111, %v1103
  %v1138 = vpack.c.bf16 %v1112, %v1104
  %v1139 = vpack.c.bf16 %v1113, %v1105
  %v1140 = vpack.c.bf16 %v1114, %v1106
  %v1141 = vpack.c.bf16 %v1115, %v1107
  %v1142 = vpack.c.bf16 %v1116, %v1108
  %v1143 = vpack.c.bf16 %v1125, %v1117
  %v1144 = vpack.c.bf16 %v1126, %v1118
  %v1145 = vpack.c.bf16 %v1127, %v1119
  %v1146 = vpack.c.bf16 %v1128, %v1120
  %v1147 = vpack.c.bf16 %v1129, %v1121
  %v1148 = vpack.c.bf16 %v1130, %v1122
  %v1149 = vpack.c.bf16 %v1131, %v1123
  %v1150 = vpack.c.bf16 %v1132, %v1124
  %1152 = vset.pattern.permute.xlu0 0
  %1153 = vperm.xlu0 %1152, %v1134
  %v1154 = vpop.permute.xlu0 %1153
  %v1157 = vsel %vm818, %v1133, 0
  %1159 = vmatprep.subr.bf16.mxu0 0
  %1160 = vmatpush1.bf16.msra.mxu0 0
  %1161 = vmatprep.subr.bf16.mxu0 0
  %1162 = vmatpush1.bf16.msra.mxu0 0
  %1163 = vmatprep.subr.bf16.mxu0 0
  %1164 = vmatpush1.bf16.msra.mxu0 0
  %1165 = vmatprep.subr.bf16.mxu0 0
  %1166 = vmatpush1.bf16.msra.mxu0 0
  %1167 = vmatprep.subr.bf16.mxu0 0
  %1168 = vmatpush1.bf16.msra.mxu0 0
  %1169 = vmatprep.subr.bf16.mxu0 0
  %1170 = vmatpush1.bf16.msra.mxu0 0
  %1171 = vmatprep.subr.bf16.mxu0 %v1144
  %1172 = vmatpush1.bf16.msra.mxu0 %v1143
  %1173 = vmatprep.subr.bf16.mxu0 %v1136
  %1174 = vmatpush1.bf16.msra.mxu0 %v1135
  %1175 = vmatprep.subr.bf16.mxu0 0
  %1176 = vmatpush2.bf16.msra.mxu0 0
  %1177 = vmatprep.subr.bf16.mxu0 0
  %1178 = vmatpush2.bf16.msra.mxu0 0
  %1179 = vmatprep.subr.bf16.mxu0 0
  %1180 = vmatpush2.bf16.msra.mxu0 0
  %1181 = vmatprep.subr.bf16.mxu0 0
  %1182 = vmatpush2.bf16.msra.mxu0 0
  %1183 = vmatprep.subr.bf16.mxu0 0
  %1184 = vmatpush2.bf16.msra.mxu0 0
  %1185 = vmatprep.subr.bf16.mxu0 0
  %1186 = vmatpush2.bf16.msra.mxu0 0
  %1187 = vmatprep.subr.bf16.mxu0 0
  %1188 = vmatpush2.bf16.msra.mxu0 0
  %1189 = vmatprep.subr.bf16.mxu0 0
  %1190 = vmatpush2.bf16.msra.mxu0 0
  %1191 = vmatprep.mubr.bf16.mxu0 0
  %1192 = vmatmul.mubr.bf16.gmra.mxu0 %v1157
  %v1193 = vpop.f32.mrf.mxu0
  %v1194 = vadd.f32 %v1154, %v1193
  %v1195 = vpop.f32.mrf.mxu0
  %v1196 = vadd.f32 %v1154, %v1195
  %v1197 = vpop.f32.mrf.mxu0
  %v1198 = vpop.f32.mrf.mxu0
  %1199 = vdwg.mxu0
  %1200 = vmatprep.subr.bf16.mxu0 0
  %1201 = vmatpush1.bf16.msra.mxu0 0
  %1202 = vmatprep.subr.bf16.mxu0 0
  %1203 = vmatpush1.bf16.msra.mxu0 0
  %1204 = vmatprep.subr.bf16.mxu0 0
  %1205 = vmatpush1.bf16.msra.mxu0 0
  %1206 = vmatprep.subr.bf16.mxu0 0
  %1207 = vmatpush1.bf16.msra.mxu0 0
  %1208 = vmatprep.subr.bf16.mxu0 0
  %1209 = vmatpush1.bf16.msra.mxu0 0
  %1210 = vmatprep.subr.bf16.mxu0 0
  %1211 = vmatpush1.bf16.msra.mxu0 0
  %1212 = vmatprep.subr.bf16.mxu0 %v1146
  %1213 = vmatpush1.bf16.msra.mxu0 %v1145
  %1214 = vmatprep.subr.bf16.mxu0 %v1138
  %1215 = vmatpush1.bf16.msra.mxu0 %v1137
  %1216 = vmatprep.subr.bf16.mxu0 0
  %1217 = vmatpush2.bf16.msra.mxu0 0
  %1218 = vmatprep.subr.bf16.mxu0 0
  %1219 = vmatpush2.bf16.msra.mxu0 0
  %1220 = vmatprep.subr.bf16.mxu0 0
  %1221 = vmatpush2.bf16.msra.mxu0 0
  %1222 = vmatprep.subr.bf16.mxu0 0
  %1223 = vmatpush2.bf16.msra.mxu0 0
  %1224 = vmatprep.subr.bf16.mxu0 0
  %1225 = vmatpush2.bf16.msra.mxu0 0
  %1226 = vmatprep.subr.bf16.mxu0 0
  %1227 = vmatpush2.bf16.msra.mxu0 0
  %1228 = vmatprep.subr.bf16.mxu0 0
  %1229 = vmatpush2.bf16.msra.mxu0 0
  %1230 = vmatprep.subr.bf16.mxu0 0
  %1231 = vmatpush2.bf16.msra.mxu0 0
  %1232 = vmatprep.mubr.bf16.mxu0 0
  %1233 = vmatmul.mubr.bf16.gmra.mxu0 %v1157
  %v1234 = vpop.f32.mrf.mxu0
  %v1235 = vadd.f32 %v1154, %v1234
  %v1236 = vpop.f32.mrf.mxu0
  %v1237 = vadd.f32 %v1154, %v1236
  %v1238 = vpop.f32.mrf.mxu0
  %v1239 = vpop.f32.mrf.mxu0
  %1240 = vdwg.mxu0
  %1241 = vmatprep.subr.bf16.mxu0 0
  %1242 = vmatpush1.bf16.msra.mxu0 0
  %1243 = vmatprep.subr.bf16.mxu0 0
  %1244 = vmatpush1.bf16.msra.mxu0 0
  %1245 = vmatprep.subr.bf16.mxu0 0
  %1246 = vmatpush1.bf16.msra.mxu0 0
  %1247 = vmatprep.subr.bf16.mxu0 0
  %1248 = vmatpush1.bf16.msra.mxu0 0
  %1249 = vmatprep.subr.bf16.mxu0 0
  %1250 = vmatpush1.bf16.msra.mxu0 0
  %1251 = vmatprep.subr.bf16.mxu0 0
  %1252 = vmatpush1.bf16.msra.mxu0 0
  %1253 = vmatprep.subr.bf16.mxu0 %v1148
  %1254 = vmatpush1.bf16.msra.mxu0 %v1147
  %1255 = vmatprep.subr.bf16.mxu0 %v1140
  %1256 = vmatpush1.bf16.msra.mxu0 %v1139
  %1257 = vmatprep.subr.bf16.mxu0 0
  %1258 = vmatpush2.bf16.msra.mxu0 0
  %1259 = vmatprep.subr.bf16.mxu0 0
  %1260 = vmatpush2.bf16.msra.mxu0 0
  %1261 = vmatprep.subr.bf16.mxu0 0
  %1262 = vmatpush2.bf16.msra.mxu0 0
  %1263 = vmatprep.subr.bf16.mxu0 0
  %1264 = vmatpush2.bf16.msra.mxu0 0
  %1265 = vmatprep.subr.bf16.mxu0 0
  %1266 = vmatpush2.bf16.msra.mxu0 0
  %1267 = vmatprep.subr.bf16.mxu0 0
  %1268 = vmatpush2.bf16.msra.mxu0 0
  %1269 = vmatprep.subr.bf16.mxu0 0
  %1270 = vmatpush2.bf16.msra.mxu0 0
  %1271 = vmatprep.subr.bf16.mxu0 0
  %1272 = vmatpush2.bf16.msra.mxu0 0
  %1273 = vmatprep.mubr.bf16.mxu0 0
  %1274 = vmatmul.mubr.bf16.gmra.mxu0 %v1157
  %v1275 = vpop.f32.mrf.mxu0
  %v1276 = vadd.f32 %v1154, %v1275
  %v1277 = vpop.f32.mrf.mxu0
  %v1278 = vadd.f32 %v1154, %v1277
  %v1279 = vpop.f32.mrf.mxu0
  %v1280 = vpop.f32.mrf.mxu0
  %1281 = vdwg.mxu0
  %1282 = vmatprep.subr.bf16.mxu0 0
  %1283 = vmatpush1.bf16.msra.mxu0 0
  %1284 = vmatprep.subr.bf16.mxu0 0
  %1285 = vmatpush1.bf16.msra.mxu0 0
  %1286 = vmatprep.subr.bf16.mxu0 0
  %1287 = vmatpush1.bf16.msra.mxu0 0
  %1288 = vmatprep.subr.bf16.mxu0 0
  %1289 = vmatpush1.bf16.msra.mxu0 0
  %1290 = vmatprep.subr.bf16.mxu0 0
  %1291 = vmatpush1.bf16.msra.mxu0 0
  %1292 = vmatprep.subr.bf16.mxu0 0
  %1293 = vmatpush1.bf16.msra.mxu0 0
  %1294 = vmatprep.subr.bf16.mxu0 %v1150
  %1295 = vmatpush1.bf16.msra.mxu0 %v1149
  %1296 = vmatprep.subr.bf16.mxu0 %v1142
  %1297 = vmatpush1.bf16.msra.mxu0 %v1141
  %1298 = vmatprep.subr.bf16.mxu0 0
  %1299 = vmatpush2.bf16.msra.mxu0 0
  %1300 = vmatprep.subr.bf16.mxu0 0
  %1301 = vmatpush2.bf16.msra.mxu0 0
  %1302 = vmatprep.subr.bf16.mxu0 0
  %1303 = vmatpush2.bf16.msra.mxu0 0
  %1304 = vmatprep.subr.bf16.mxu0 0
  %1305 = vmatpush2.bf16.msra.mxu0 0
  %1306 = vmatprep.subr.bf16.mxu0 0
  %1307 = vmatpush2.bf16.msra.mxu0 0
  %1308 = vmatprep.subr.bf16.mxu0 0
  %1309 = vmatpush2.bf16.msra.mxu0 0
  %1310 = vmatprep.subr.bf16.mxu0 0
  %1311 = vmatpush2.bf16.msra.mxu0 0
  %1312 = vmatprep.subr.bf16.mxu0 0
  %1313 = vmatpush2.bf16.msra.mxu0 0
  %1314 = vmatprep.mubr.bf16.mxu0 0
  %1315 = vmatmul.mubr.bf16.gmra.mxu0 %v1157
  %v1316 = vpop.f32.mrf.mxu0
  %v1317 = vadd.f32 %v1154, %v1316
  %v1318 = vpop.f32.mrf.mxu0
  %v1319 = vadd.f32 %v1154, %v1318
  %v1320 = vpop.f32.mrf.mxu0
  %v1321 = vpop.f32.mrf.mxu0
  %1322 = vdwg.mxu0
  %1323 = vxpose.xlu0.b32.start [1/16] %v1194, 128
  %1324 = vxpose.xlu0.b32.cont [2/16] 0.0, 128
  %1325 = vxpose.xlu0.b32.cont [3/16] 0.0, 128
  %1326 = vxpose.xlu0.b32.cont [4/16] 0.0, 128
  %1327 = vxpose.xlu0.b32.cont [5/16] 0.0, 128
  %1328 = vxpose.xlu0.b32.cont [6/16] 0.0, 128
  %1329 = vxpose.xlu0.b32.cont [7/16] 0.0, 128
  %1330 = vxpose.xlu0.b32.cont [8/16] 0.0, 128
  %1331 = vxpose.xlu0.b32.cont [9/16] 0.0, 128
  %1332 = vxpose.xlu0.b32.cont [10/16] 0.0, 128
  %1333 = vxpose.xlu0.b32.cont [11/16] 0.0, 128
  %1334 = vxpose.xlu0.b32.cont [12/16] 0.0, 128
  %1335 = vxpose.xlu0.b32.cont [13/16] 0.0, 128
  %1336 = vxpose.xlu0.b32.cont [14/16] 0.0, 128
  %1337 = vxpose.xlu0.b32.cont [15/16] 0.0, 128
  %1338 = vxpose.xlu0.b32.end [16/16] 0.0, 128
  %v1339 = vpop.trf.xlu0
  %v1340 = vpop.trf.xlu0
  %v1341 = vpop.trf.xlu0
  %v1342 = vpop.trf.xlu0
  %v1343 = vpop.trf.xlu0
  %v1344 = vpop.trf.xlu0
  %v1345 = vpop.trf.xlu0
  %v1346 = vpop.trf.xlu0
  %v1347 = vpop.trf.xlu0
  %v1348 = vpop.trf.xlu0
  %v1349 = vpop.trf.xlu0
  %v1350 = vpop.trf.xlu0
  %v1351 = vpop.trf.xlu0
  %v1352 = vpop.trf.xlu0
  %v1353 = vpop.trf.xlu0
  %v1354 = vpop.trf.xlu0
  %1355 = vxpose.xlu0.b32.start [1/16] %v1196, 128
  %1356 = vxpose.xlu0.b32.cont [2/16] 0.0, 128
  %1357 = vxpose.xlu0.b32.cont [3/16] 0.0, 128
  %1358 = vxpose.xlu0.b32.cont [4/16] 0.0, 128
  %1359 = vxpose.xlu0.b32.cont [5/16] 0.0, 128
  %1360 = vxpose.xlu0.b32.cont [6/16] 0.0, 128
  %1361 = vxpose.xlu0.b32.cont [7/16] 0.0, 128
  %1362 = vxpose.xlu0.b32.cont [8/16] 0.0, 128
  %1363 = vxpose.xlu0.b32.cont [9/16] 0.0, 128
  %1364 = vxpose.xlu0.b32.cont [10/16] 0.0, 128
  %1365 = vxpose.xlu0.b32.cont [11/16] 0.0, 128
  %1366 = vxpose.xlu0.b32.cont [12/16] 0.0, 128
  %1367 = vxpose.xlu0.b32.cont [13/16] 0.0, 128
  %1368 = vxpose.xlu0.b32.cont [14/16] 0.0, 128
  %1369 = vxpose.xlu0.b32.cont [15/16] 0.0, 128
  %1370 = vxpose.xlu0.b32.end [16/16] 0.0, 128
  %v1371 = vpop.trf.xlu0
  %v1372 = vpop.trf.xlu0
  %v1373 = vpop.trf.xlu0
  %v1374 = vpop.trf.xlu0
  %v1375 = vpop.trf.xlu0
  %v1376 = vpop.trf.xlu0
  %v1377 = vpop.trf.xlu0
  %v1378 = vpop.trf.xlu0
  %v1379 = vpop.trf.xlu0
  %v1380 = vpop.trf.xlu0
  %v1381 = vpop.trf.xlu0
  %v1382 = vpop.trf.xlu0
  %v1383 = vpop.trf.xlu0
  %v1384 = vpop.trf.xlu0
  %v1385 = vpop.trf.xlu0
  %v1386 = vpop.trf.xlu0
  %1387 = vxpose.xlu0.b32.start [1/16] %v1235, 128
  %1388 = vxpose.xlu0.b32.cont [2/16] 0.0, 128
  %1389 = vxpose.xlu0.b32.cont [3/16] 0.0, 128
  %1390 = vxpose.xlu0.b32.cont [4/16] 0.0, 128
  %1391 = vxpose.xlu0.b32.cont [5/16] 0.0, 128
  %1392 = vxpose.xlu0.b32.cont [6/16] 0.0, 128
  %1393 = vxpose.xlu0.b32.cont [7/16] 0.0, 128
  %1394 = vxpose.xlu0.b32.cont [8/16] 0.0, 128
  %1395 = vxpose.xlu0.b32.cont [9/16] 0.0, 128
  %1396 = vxpose.xlu0.b32.cont [10/16] 0.0, 128
  %1397 = vxpose.xlu0.b32.cont [11/16] 0.0, 128
  %1398 = vxpose.xlu0.b32.cont [12/16] 0.0, 128
  %1399 = vxpose.xlu0.b32.cont [13/16] 0.0, 128
  %1400 = vxpose.xlu0.b32.cont [14/16] 0.0, 128
  %1401 = vxpose.xlu0.b32.cont [15/16] 0.0, 128
  %1402 = vxpose.xlu0.b32.end [16/16] 0.0, 128
  %v1403 = vpop.trf.xlu0
  %v1404 = vpop.trf.xlu0
  %v1405 = vpop.trf.xlu0
  %v1406 = vpop.trf.xlu0
  %v1407 = vpop.trf.xlu0
  %v1408 = vpop.trf.xlu0
  %v1409 = vpop.trf.xlu0
  %v1410 = vpop.trf.xlu0
  %v1411 = vpop.trf.xlu0
  %v1412 = vpop.trf.xlu0
  %v1413 = vpop.trf.xlu0
  %v1414 = vpop.trf.xlu0
  %v1415 = vpop.trf.xlu0
  %v1416 = vpop.trf.xlu0
  %v1417 = vpop.trf.xlu0
  %v1418 = vpop.trf.xlu0
  %1419 = vxpose.xlu0.b32.start [1/16] %v1237, 128
  %1420 = vxpose.xlu0.b32.cont [2/16] 0.0, 128
  %1421 = vxpose.xlu0.b32.cont [3/16] 0.0, 128
  %1422 = vxpose.xlu0.b32.cont [4/16] 0.0, 128
  %1423 = vxpose.xlu0.b32.cont [5/16] 0.0, 128
  %1424 = vxpose.xlu0.b32.cont [6/16] 0.0, 128
  %1425 = vxpose.xlu0.b32.cont [7/16] 0.0, 128
  %1426 = vxpose.xlu0.b32.cont [8/16] 0.0, 128
  %1427 = vxpose.xlu0.b32.cont [9/16] 0.0, 128
  %1428 = vxpose.xlu0.b32.cont [10/16] 0.0, 128
  %1429 = vxpose.xlu0.b32.cont [11/16] 0.0, 128
  %1430 = vxpose.xlu0.b32.cont [12/16] 0.0, 128
  %1431 = vxpose.xlu0.b32.cont [13/16] 0.0, 128
  %1432 = vxpose.xlu0.b32.cont [14/16] 0.0, 128
  %1433 = vxpose.xlu0.b32.cont [15/16] 0.0, 128
  %1434 = vxpose.xlu0.b32.end [16/16] 0.0, 128
  %v1435 = vpop.trf.xlu0
  %v1436 = vpop.trf.xlu0
  %v1437 = vpop.trf.xlu0
  %v1438 = vpop.trf.xlu0
  %v1439 = vpop.trf.xlu0
  %v1440 = vpop.trf.xlu0
  %v1441 = vpop.trf.xlu0
  %v1442 = vpop.trf.xlu0
  %v1443 = vpop.trf.xlu0
  %v1444 = vpop.trf.xlu0
  %v1445 = vpop.trf.xlu0
  %v1446 = vpop.trf.xlu0
  %v1447 = vpop.trf.xlu0
  %v1448 = vpop.trf.xlu0
  %v1449 = vpop.trf.xlu0
  %v1450 = vpop.trf.xlu0
  %1451 = vxpose.xlu0.b32.start [1/16] %v1276, 128
  %1452 = vxpose.xlu0.b32.cont [2/16] 0.0, 128
  %1453 = vxpose.xlu0.b32.cont [3/16] 0.0, 128
  %1454 = vxpose.xlu0.b32.cont [4/16] 0.0, 128
  %1455 = vxpose.xlu0.b32.cont [5/16] 0.0, 128
  %1456 = vxpose.xlu0.b32.cont [6/16] 0.0, 128
  %1457 = vxpose.xlu0.b32.cont [7/16] 0.0, 128
  %1458 = vxpose.xlu0.b32.cont [8/16] 0.0, 128
  %1459 = vxpose.xlu0.b32.cont [9/16] 0.0, 128
  %1460 = vxpose.xlu0.b32.cont [10/16] 0.0, 128
  %1461 = vxpose.xlu0.b32.cont [11/16] 0.0, 128
  %1462 = vxpose.xlu0.b32.cont [12/16] 0.0, 128
  %1463 = vxpose.xlu0.b32.cont [13/16] 0.0, 128
  %1464 = vxpose.xlu0.b32.cont [14/16] 0.0, 128
  %1465 = vxpose.xlu0.b32.cont [15/16] 0.0, 128
  %1466 = vxpose.xlu0.b32.end [16/16] 0.0, 128
  %v1467 = vpop.trf.xlu0
  %v1468 = vpop.trf.xlu0
  %v1469 = vpop.trf.xlu0
  %v1470 = vpop.trf.xlu0
  %v1471 = vpop.trf.xlu0
  %v1472 = vpop.trf.xlu0
  %v1473 = vpop.trf.xlu0
  %v1474 = vpop.trf.xlu0
  %v1475 = vpop.trf.xlu0
  %v1476 = vpop.trf.xlu0
  %v1477 = vpop.trf.xlu0
  %v1478 = vpop.trf.xlu0
  %v1479 = vpop.trf.xlu0
  %v1480 = vpop.trf.xlu0
  %v1481 = vpop.trf.xlu0
  %v1482 = vpop.trf.xlu0
  %1483 = vxpose.xlu0.b32.start [1/16] %v1278, 128
  %1484 = vxpose.xlu0.b32.cont [2/16] 0.0, 128
  %1485 = vxpose.xlu0.b32.cont [3/16] 0.0, 128
  %1486 = vxpose.xlu0.b32.cont [4/16] 0.0, 128
  %1487 = vxpose.xlu0.b32.cont [5/16] 0.0, 128
  %1488 = vxpose.xlu0.b32.cont [6/16] 0.0, 128
  %1489 = vxpose.xlu0.b32.cont [7/16] 0.0, 128
  %1490 = vxpose.xlu0.b32.cont [8/16] 0.0, 128
  %1491 = vxpose.xlu0.b32.cont [9/16] 0.0, 128
  %1492 = vxpose.xlu0.b32.cont [10/16] 0.0, 128
  %1493 = vxpose.xlu0.b32.cont [11/16] 0.0, 128
  %1494 = vxpose.xlu0.b32.cont [12/16] 0.0, 128
  %1495 = vxpose.xlu0.b32.cont [13/16] 0.0, 128
  %1496 = vxpose.xlu0.b32.cont [14/16] 0.0, 128
  %1497 = vxpose.xlu0.b32.cont [15/16] 0.0, 128
  %1498 = vxpose.xlu0.b32.end [16/16] 0.0, 128
  %v1499 = vpop.trf.xlu0
  %v1500 = vpop.trf.xlu0
  %v1501 = vpop.trf.xlu0
  %v1502 = vpop.trf.xlu0
  %v1503 = vpop.trf.xlu0
  %v1504 = vpop.trf.xlu0
  %v1505 = vpop.trf.xlu0
  %v1506 = vpop.trf.xlu0
  %v1507 = vpop.trf.xlu0
  %v1508 = vpop.trf.xlu0
  %v1509 = vpop.trf.xlu0
  %v1510 = vpop.trf.xlu0
  %v1511 = vpop.trf.xlu0
  %v1512 = vpop.trf.xlu0
  %v1513 = vpop.trf.xlu0
  %v1514 = vpop.trf.xlu0
  %1515 = vxpose.xlu0.b32.start [1/16] %v1317, 128
  %1516 = vxpose.xlu0.b32.cont [2/16] 0.0, 128
  %1517 = vxpose.xlu0.b32.cont [3/16] 0.0, 128
  %1518 = vxpose.xlu0.b32.cont [4/16] 0.0, 128
  %1519 = vxpose.xlu0.b32.cont [5/16] 0.0, 128
  %1520 = vxpose.xlu0.b32.cont [6/16] 0.0, 128
  %1521 = vxpose.xlu0.b32.cont [7/16] 0.0, 128
  %1522 = vxpose.xlu0.b32.cont [8/16] 0.0, 128
  %1523 = vxpose.xlu0.b32.cont [9/16] 0.0, 128
  %1524 = vxpose.xlu0.b32.cont [10/16] 0.0, 128
  %1525 = vxpose.xlu0.b32.cont [11/16] 0.0, 128
  %1526 = vxpose.xlu0.b32.cont [12/16] 0.0, 128
  %1527 = vxpose.xlu0.b32.cont [13/16] 0.0, 128
  %1528 = vxpose.xlu0.b32.cont [14/16] 0.0, 128
  %1529 = vxpose.xlu0.b32.cont [15/16] 0.0, 128
  %1530 = vxpose.xlu0.b32.end [16/16] 0.0, 128
  %v1531 = vpop.trf.xlu0
  %v1532 = vpop.trf.xlu0
  %v1533 = vpop.trf.xlu0
  %v1534 = vpop.trf.xlu0
  %v1535 = vpop.trf.xlu0
  %v1536 = vpop.trf.xlu0
  %v1537 = vpop.trf.xlu0
  %v1538 = vpop.trf.xlu0
  %v1539 = vpop.trf.xlu0
  %v1540 = vpop.trf.xlu0
  %v1541 = vpop.trf.xlu0
  %v1542 = vpop.trf.xlu0
  %v1543 = vpop.trf.xlu0
  %v1544 = vpop.trf.xlu0
  %v1545 = vpop.trf.xlu0
  %v1546 = vpop.trf.xlu0
  %1547 = vxpose.xlu0.b32.start [1/16] %v1319, 128
  %1548 = vxpose.xlu0.b32.cont [2/16] 0.0, 128
  %1549 = vxpose.xlu0.b32.cont [3/16] 0.0, 128
  %1550 = vxpose.xlu0.b32.cont [4/16] 0.0, 128
  %1551 = vxpose.xlu0.b32.cont [5/16] 0.0, 128
  %1552 = vxpose.xlu0.b32.cont [6/16] 0.0, 128
  %1553 = vxpose.xlu0.b32.cont [7/16] 0.0, 128
  %1554 = vxpose.xlu0.b32.cont [8/16] 0.0, 128
  %1555 = vxpose.xlu0.b32.cont [9/16] 0.0, 128
  %1556 = vxpose.xlu0.b32.cont [10/16] 0.0, 128
  %1557 = vxpose.xlu0.b32.cont [11/16] 0.0, 128
  %1558 = vxpose.xlu0.b32.cont [12/16] 0.0, 128
  %1559 = vxpose.xlu0.b32.cont [13/16] 0.0, 128
  %1560 = vxpose.xlu0.b32.cont [14/16] 0.0, 128
  %1561 = vxpose.xlu0.b32.cont [15/16] 0.0, 128
  %1562 = vxpose.xlu0.b32.end [16/16] 0.0, 128
  %v1563 = vpop.trf.xlu0
  %v1564 = vpop.trf.xlu0
  %v1565 = vpop.trf.xlu0
  %v1566 = vpop.trf.xlu0
  %v1567 = vpop.trf.xlu0
  %v1568 = vpop.trf.xlu0
  %v1569 = vpop.trf.xlu0
  %v1570 = vpop.trf.xlu0
  %v1571 = vpop.trf.xlu0
  %v1572 = vpop.trf.xlu0
  %v1573 = vpop.trf.xlu0
  %v1574 = vpop.trf.xlu0
  %v1575 = vpop.trf.xlu0
  %v1576 = vpop.trf.xlu0
  %v1577 = vpop.trf.xlu0
  %v1578 = vpop.trf.xlu0
  %vm1579 = vcmask 64512
  %1580 = vst.msk [vmem:[%s7] sm:$0xff] %vm1579, %v1339
  %1581 = vst.msk [vmem:[%s7 + $0x8] sm:$0xff] %vm1579, %v1340
  %1582 = vst.msk [vmem:[%s7 + $0x10] sm:$0xff] %vm1579, %v1341
  %1583 = vst.msk [vmem:[%s7 + $0x18] sm:$0xff] %vm1579, %v1342
  %1584 = vst.msk [vmem:[%s7 + $0x20] sm:$0xff] %vm1579, %v1343
  %1585 = vst.msk [vmem:[%s7 + $0x28] sm:$0xff] %vm1579, %v1344
  %1586 = vst.msk [vmem:[%s7 + $0x30] sm:$0xff] %vm1579, %v1345
  %1587 = vst.msk [vmem:[%s7 + $0x38] sm:$0xff] %vm1579, %v1346
  %1588 = vst.msk [vmem:[%s7 + $0x40] sm:$0xff] %vm1579, %v1347
  %1589 = vst.msk [vmem:[%s7 + $0x48] sm:$0xff] %vm1579, %v1348
  %1590 = vst.msk [vmem:[%s7 + $0x50] sm:$0xff] %vm1579, %v1349
  %1591 = vst.msk [vmem:[%s7 + $0x58] sm:$0xff] %vm1579, %v1350
  %1592 = vst.msk [vmem:[%s7 + $0x60] sm:$0xff] %vm1579, %v1351
  %1593 = vst.msk [vmem:[%s7 + $0x68] sm:$0xff] %vm1579, %v1352
  %1594 = vst.msk [vmem:[%s7 + $0x70] sm:$0xff] %vm1579, %v1353
  %1595 = vst.msk [vmem:[%s7 + $0x78] sm:$0xff] %vm1579, %v1354
  %1596 = vst.msk [vmem:[%s7 + $0x80] sm:$0xff] %vm1579, %v1371
  %1597 = vst.msk [vmem:[%s7 + $0x88] sm:$0xff] %vm1579, %v1372
  %1598 = vst.msk [vmem:[%s7 + $0x90] sm:$0xff] %vm1579, %v1373
  %1599 = vst.msk [vmem:[%s7 + $0x98] sm:$0xff] %vm1579, %v1374
  %1600 = vst.msk [vmem:[%s7 + $0xa0] sm:$0xff] %vm1579, %v1375
  %1601 = vst.msk [vmem:[%s7 + $0xa8] sm:$0xff] %vm1579, %v1376
  %1602 = vst.msk [vmem:[%s7 + $0xb0] sm:$0xff] %vm1579, %v1377
  %1603 = vst.msk [vmem:[%s7 + $0xb8] sm:$0xff] %vm1579, %v1378
  %1604 = vst.msk [vmem:[%s7 + $0xc0] sm:$0xff] %vm1579, %v1379
  %1605 = vst.msk [vmem:[%s7 + $0xc8] sm:$0xff] %vm1579, %v1380
  %1606 = vst.msk [vmem:[%s7 + $0xd0] sm:$0xff] %vm1579, %v1381
  %1607 = vst.msk [vmem:[%s7 + $0xd8] sm:$0xff] %vm1579, %v1382
  %1608 = vst.msk [vmem:[%s7 + $0xe0] sm:$0xff] %vm1579, %v1383
  %1609 = vst.msk [vmem:[%s7 + $0xe8] sm:$0xff] %vm1579, %v1384
  %1610 = vst.msk [vmem:[%s7 + $0xf0] sm:$0xff] %vm1579, %v1385
  %1611 = vst.msk [vmem:[%s7 + $0xf8] sm:$0xff] %vm1579, %v1386
  %1612 = vst.msk [vmem:[%s7 + $0x100] sm:$0xff] %vm1579, %v1403
  %1613 = vst.msk [vmem:[%s7 + $0x108] sm:$0xff] %vm1579, %v1404
  %1614 = vst.msk [vmem:[%s7 + $0x110] sm:$0xff] %vm1579, %v1405
  %1615 = vst.msk [vmem:[%s7 + $0x118] sm:$0xff] %vm1579, %v1406
  %1616 = vst.msk [vmem:[%s7 + $0x120] sm:$0xff] %vm1579, %v1407
  %1617 = vst.msk [vmem:[%s7 + $0x128] sm:$0xff] %vm1579, %v1408
  %1618 = vst.msk [vmem:[%s7 + $0x130] sm:$0xff] %vm1579, %v1409
  %1619 = vst.msk [vmem:[%s7 + $0x138] sm:$0xff] %vm1579, %v1410
  %1620 = vst.msk [vmem:[%s7 + $0x140] sm:$0xff] %vm1579, %v1411
  %1621 = vst.msk [vmem:[%s7 + $0x148] sm:$0xff] %vm1579, %v1412
  %1622 = vst.msk [vmem:[%s7 + $0x150] sm:$0xff] %vm1579, %v1413
  %1623 = vst.msk [vmem:[%s7 + $0x158] sm:$0xff] %vm1579, %v1414
  %1624 = vst.msk [vmem:[%s7 + $0x160] sm:$0xff] %vm1579, %v1415
  %1625 = vst.msk [vmem:[%s7 + $0x168] sm:$0xff] %vm1579, %v1416
  %1626 = vst.msk [vmem:[%s7 + $0x170] sm:$0xff] %vm1579, %v1417
  %1627 = vst.msk [vmem:[%s7 + $0x178] sm:$0xff] %vm1579, %v1418
  %1628 = vst.msk [vmem:[%s7 + $0x180] sm:$0xff] %vm1579, %v1435
  %1629 = vst.msk [vmem:[%s7 + $0x188] sm:$0xff] %vm1579, %v1436
  %1630 = vst.msk [vmem:[%s7 + $0x190] sm:$0xff] %vm1579, %v1437
  %1631 = vst.msk [vmem:[%s7 + $0x198] sm:$0xff] %vm1579, %v1438
  %1632 = vst.msk [vmem:[%s7 + $0x1a0] sm:$0xff] %vm1579, %v1439
  %1633 = vst.msk [vmem:[%s7 + $0x1a8] sm:$0xff] %vm1579, %v1440
  %1634 = vst.msk [vmem:[%s7 + $0x1b0] sm:$0xff] %vm1579, %v1441
  %1635 = vst.msk [vmem:[%s7 + $0x1b8] sm:$0xff] %vm1579, %v1442
  %1636 = vst.msk [vmem:[%s7 + $0x1c0] sm:$0xff] %vm1579, %v1443
  %1637 = vst.msk [vmem:[%s7 + $0x1c8] sm:$0xff] %vm1579, %v1444
  %1638 = vst.msk [vmem:[%s7 + $0x1d0] sm:$0xff] %vm1579, %v1445
  %1639 = vst.msk [vmem:[%s7 + $0x1d8] sm:$0xff] %vm1579, %v1446
  %1640 = vst.msk [vmem:[%s7 + $0x1e0] sm:$0xff] %vm1579, %v1447
  %1641 = vst.msk [vmem:[%s7 + $0x1e8] sm:$0xff] %vm1579, %v1448
  %1642 = vst.msk [vmem:[%s7 + $0x1f0] sm:$0xff] %vm1579, %v1449
  %1643 = vst.msk [vmem:[%s7 + $0x1f8] sm:$0xff] %vm1579, %v1450
  %1644 = vst.msk [vmem:[%s7 + $0x200] sm:$0xff] %vm1579, %v1467
  %1645 = vst.msk [vmem:[%s7 + $0x208] sm:$0xff] %vm1579, %v1468
  %1646 = vst.msk [vmem:[%s7 + $0x210] sm:$0xff] %vm1579, %v1469
  %1647 = vst.msk [vmem:[%s7 + $0x218] sm:$0xff] %vm1579, %v1470
  %1648 = vst.msk [vmem:[%s7 + $0x220] sm:$0xff] %vm1579, %v1471
  %1649 = vst.msk [vmem:[%s7 + $0x228] sm:$0xff] %vm1579, %v1472
  %1650 = vst.msk [vmem:[%s7 + $0x230] sm:$0xff] %vm1579, %v1473
  %1651 = vst.msk [vmem:[%s7 + $0x238] sm:$0xff] %vm1579, %v1474
  %1652 = vst.msk [vmem:[%s7 + $0x240] sm:$0xff] %vm1579, %v1475
  %1653 = vst.msk [vmem:[%s7 + $0x248] sm:$0xff] %vm1579, %v1476
  %1654 = vst.msk [vmem:[%s7 + $0x250] sm:$0xff] %vm1579, %v1477
  %1655 = vst.msk [vmem:[%s7 + $0x258] sm:$0xff] %vm1579, %v1478
  %1656 = vst.msk [vmem:[%s7 + $0x260] sm:$0xff] %vm1579, %v1479
  %1657 = vst.msk [vmem:[%s7 + $0x268] sm:$0xff] %vm1579, %v1480
  %1658 = vst.msk [vmem:[%s7 + $0x270] sm:$0xff] %vm1579, %v1481
  %1659 = vst.msk [vmem:[%s7 + $0x278] sm:$0xff] %vm1579, %v1482
  %1660 = vst.msk [vmem:[%s7 + $0x280] sm:$0xff] %vm1579, %v1499
  %1661 = vst.msk [vmem:[%s7 + $0x288] sm:$0xff] %vm1579, %v1500
  %1662 = vst.msk [vmem:[%s7 + $0x290] sm:$0xff] %vm1579, %v1501
  %1663 = vst.msk [vmem:[%s7 + $0x298] sm:$0xff] %vm1579, %v1502
  %1664 = vst.msk [vmem:[%s7 + $0x2a0] sm:$0xff] %vm1579, %v1503
  %1665 = vst.msk [vmem:[%s7 + $0x2a8] sm:$0xff] %vm1579, %v1504
  %1666 = vst.msk [vmem:[%s7 + $0x2b0] sm:$0xff] %vm1579, %v1505
  %1667 = vst.msk [vmem:[%s7 + $0x2b8] sm:$0xff] %vm1579, %v1506
  %1668 = vst.msk [vmem:[%s7 + $0x2c0] sm:$0xff] %vm1579, %v1507
  %1669 = vst.msk [vmem:[%s7 + $0x2c8] sm:$0xff] %vm1579, %v1508
  %1670 = vst.msk [vmem:[%s7 + $0x2d0] sm:$0xff] %vm1579, %v1509
  %1671 = vst.msk [vmem:[%s7 + $0x2d8] sm:$0xff] %vm1579, %v1510
  %1672 = vst.msk [vmem:[%s7 + $0x2e0] sm:$0xff] %vm1579, %v1511
  %1673 = vst.msk [vmem:[%s7 + $0x2e8] sm:$0xff] %vm1579, %v1512
  %1674 = vst.msk [vmem:[%s7 + $0x2f0] sm:$0xff] %vm1579, %v1513
  %1675 = vst.msk [vmem:[%s7 + $0x2f8] sm:$0xff] %vm1579, %v1514
  %1676 = vst.msk [vmem:[%s7 + $0x300] sm:$0xff] %vm1579, %v1531
  %1677 = vst.msk [vmem:[%s7 + $0x308] sm:$0xff] %vm1579, %v1532
  %1678 = vst.msk [vmem:[%s7 + $0x310] sm:$0xff] %vm1579, %v1533
  %1679 = vst.msk [vmem:[%s7 + $0x318] sm:$0xff] %vm1579, %v1534
  %1680 = vst.msk [vmem:[%s7 + $0x320] sm:$0xff] %vm1579, %v1535
  %1681 = vst.msk [vmem:[%s7 + $0x328] sm:$0xff] %vm1579, %v1536
  %1682 = vst.msk [vmem:[%s7 + $0x330] sm:$0xff] %vm1579, %v1537
  %1683 = vst.msk [vmem:[%s7 + $0x338] sm:$0xff] %vm1579, %v1538
  %1684 = vst.msk [vmem:[%s7 + $0x340] sm:$0xff] %vm1579, %v1539
  %1685 = vst.msk [vmem:[%s7 + $0x348] sm:$0xff] %vm1579, %v1540
  %1686 = vst.msk [vmem:[%s7 + $0x350] sm:$0xff] %vm1579, %v1541
  %1687 = vst.msk [vmem:[%s7 + $0x358] sm:$0xff] %vm1579, %v1542
  %1688 = vst.msk [vmem:[%s7 + $0x360] sm:$0xff] %vm1579, %v1543
  %1689 = vst.msk [vmem:[%s7 + $0x368] sm:$0xff] %vm1579, %v1544
  %1690 = vst.msk [vmem:[%s7 + $0x370] sm:$0xff] %vm1579, %v1545
  %1691 = vst.msk [vmem:[%s7 + $0x378] sm:$0xff] %vm1579, %v1546
  %1692 = vst.msk [vmem:[%s7 + $0x380] sm:$0xff] %vm1579, %v1563
  %1693 = vst.msk [vmem:[%s7 + $0x388] sm:$0xff] %vm1579, %v1564
  %1694 = vst.msk [vmem:[%s7 + $0x390] sm:$0xff] %vm1579, %v1565
  %1695 = vst.msk [vmem:[%s7 + $0x398] sm:$0xff] %vm1579, %v1566
  %1696 = vst.msk [vmem:[%s7 + $0x3a0] sm:$0xff] %vm1579, %v1567
  %1697 = vst.msk [vmem:[%s7 + $0x3a8] sm:$0xff] %vm1579, %v1568
  %1698 = vst.msk [vmem:[%s7 + $0x3b0] sm:$0xff] %vm1579, %v1569
  %1699 = vst.msk [vmem:[%s7 + $0x3b8] sm:$0xff] %vm1579, %v1570
  %1700 = vst.msk [vmem:[%s7 + $0x3c0] sm:$0xff] %vm1579, %v1571
  %1701 = vst.msk [vmem:[%s7 + $0x3c8] sm:$0xff] %vm1579, %v1572
  %1702 = vst.msk [vmem:[%s7 + $0x3d0] sm:$0xff] %vm1579, %v1573
  %1703 = vst.msk [vmem:[%s7 + $0x3d8] sm:$0xff] %vm1579, %v1574
  %1704 = vst.msk [vmem:[%s7 + $0x3e0] sm:$0xff] %vm1579, %v1575
  %1705 = vst.msk [vmem:[%s7 + $0x3e8] sm:$0xff] %vm1579, %v1576
  %1706 = vst.msk [vmem:[%s7 + $0x3f0] sm:$0xff] %vm1579, %v1577
  %1707 = vst.msk [vmem:[%s7 + $0x3f8] sm:$0xff] %vm1579, %v1578
  // Predicated region
  $region30: #{tpu_custom_call.1} parent=0 // pred_check
    _
  $region31: #{tpu_custom_call.1} parent=0 // pred_check_branch
    %1709 = sbr.rel (0) target = $region33
  $region32: #{tpu_custom_call.1} parent=0 // pred_region
    _
  $region33: #{tpu_custom_call.1} parent=0 // pred_fallthru
    _
  // Predicated region
  $region34: #{tpu_custom_call.1} parent=0 // pred_check
    _
  $region35: #{tpu_custom_call.1} parent=0 // pred_check_branch
    %1711 = sbr.rel (0) target = $region37
  $region36: #{tpu_custom_call.1} parent=0 // pred_region
    _
  $region37: #{tpu_custom_call.1} parent=0 // pred_fallthru
    _

</llo_original>
